<compile_context>
chip_gen: v5e
topology: v5e:2x2
jax: 0.10.0
libtpu: 0.0.40
codegen_flags: <defaults>
</compile_context>

<pallas_src>
import functools
import warnings

import numpy as np
import jax
import jax.numpy as jnp
from jax import lax
from jax.experimental import pallas as pl
from jax.experimental.pallas import tpu as pltpu


_LANE = 128                 # TPU lane width
_SUBLANE = 8                # f32 sublane packing
_MAX_TILE_FRAMES = 8192     # hard cap on frames per block


# ----------------------------------------------------------------------------
# Small helpers
# ----------------------------------------------------------------------------
def _round_up(x, m):
    return ((x + m - 1) // m) * m


def _cdiv(a, b):
    return (a + b - 1) // b


_VMEM_LIMITS = None


def _vmem_limits():
    """(vmem_limit_bytes to request, per-block working budget in bytes)."""
    global _VMEM_LIMITS
    if _VMEM_LIMITS is None:
        cap = None
        try:
            info = pltpu.get_tpu_info()
            cap = int(getattr(info, "vmem_capacity_bytes", 0)) or None
        except Exception:
            cap = None
        if cap is None:
            cap = 64 << 20                       # conservative: v7x physical VMEM / core
        limit = min((cap * 3) // 4, 96 << 20)    # raise scoped limit, keep headroom
        _VMEM_LIMITS = (int(limit), int(limit) // 2)
    return _VMEM_LIMITS


def _frame_tiling(n_frames, bytes_per_frame, vmem_budget):
    """Return (padded frame count, frame tile); tile % 128 == 0, n_pad = tile * nblocks."""
    lanes = _round_up(max(int(n_frames), 1), _LANE)
    max_tile = (vmem_budget // max(int(bytes_per_frame), 1)) // _LANE * _LANE
    max_tile = max(_LANE, min(_MAX_TILE_FRAMES, max_tile))
    tile = min(max_tile, lanes)
    nb = _cdiv(lanes, tile)
    if nb == 1 and lanes > _LANE:
        # Prefer >= 2 blocks: DMA pipelining + both v7x TensorCores.
        tile = _round_up(_cdiv(lanes, 2), _LANE)
        nb = _cdiv(lanes, tile)
    elif nb > 1 and nb % 2 == 1:
        # Try to even out the block count (v7x core balance); keep only if it works.
        tile2 = _round_up(_cdiv(lanes, nb + 1), _LANE)
        nb2 = _cdiv(lanes, tile2)
        if nb2 % 2 == 0:
            tile, nb = tile2, nb2
    return tile * nb, tile


def _build_diff_matrix(pairs, trips, quads, n_beads, nd_pad, na_pad, nq_pad):
    """Static +/-1 difference matrix.  Row layout (each group padded to 8 rows):
    [pairs | angle b1 | angle b2 | dihedral b1 | dihedral b2 | dihedral b3]."""
    rows = nd_pad + 2 * na_pad + 3 * nq_pad
    d = np.zeros((rows, n_beads), np.float32)
    for r, (i, j) in enumerate(pairs):
        d[r, j] += 1.0
        d[r, i] -= 1.0
    base = nd_pad
    for r, (i, j, k) in enumerate(trips):
        d[base + r, j] += 1.0
        d[base + r, i] -= 1.0
        d[base + na_pad + r, k] += 1.0
        d[base + na_pad + r, j] -= 1.0
    base = nd_pad + 2 * na_pad
    for r, (i, j, k, l) in enumerate(quads):
        d[base + r, j] += 1.0
        d[base + r, i] -= 1.0
        d[base + nq_pad + r, k] += 1.0
        d[base + nq_pad + r, j] -= 1.0
        d[base + 2 * nq_pad + r, l] += 1.0
        d[base + 2 * nq_pad + r, k] -= 1.0
    return d


# ----------------------------------------------------------------------------
# In-kernel helpers (values are [K, T]: features on sublanes, frames on lanes)
# ----------------------------------------------------------------------------
def _dot3(u, v):
    return u[0] * v[0] + u[1] * v[1] + u[2] * v[2]


def _cross3(u, v):
    ux, uy, uz = u
    vx, vy, vz = v
    return (uy * vz - uz * vy, uz * vx - ux * vz, ux * vy - uy * vx)


# ----------------------------------------------------------------------------
# Fused kernel: distances + angles + dihedral cos/sin in one pass
# ----------------------------------------------------------------------------
def _geometry_kernel(d_ref, coords_ref, o_ref, *, nd_pad, na_pad, nq_pad,
                     acos_in_kernel):
    # d_ref:      [R, n_beads]  static +/-1 difference matrix (f32)
    # coords_ref: [3, n_beads, T]  x/y/z on leading axis, frames on lanes
    # o_ref:      [nd_pad + na_pad + 2*nq_pad, T]
    dmat = d_ref[...]
    # Gather + difference on the MXU (idle otherwise).  HIGHEST precision keeps
    # f32 coordinates from being rounded to bf16 before subtraction.
    diffs = [
        jnp.dot(dmat, coords_ref[c].astype(jnp.float32),
                preferred_element_type=jnp.float32,
                precision=lax.Precision.HIGHEST)
        for c in range(3)
    ]

    row = 0
    out = 0
    if nd_pad:                                   # pairwise distances
        d2 = None
        for c in range(3):
            v = diffs[c][row:row + nd_pad]
            d2 = v * v if d2 is None else d2 + v * v
        o_ref[out:out + nd_pad] = jnp.sqrt(d2).astype(o_ref.dtype)
        row += nd_pad
        out += nd_pad

    if na_pad:                                   # three-bead angles
        b1 = tuple(diffs[c][row:row + na_pad] for c in range(3))
        b2 = tuple(diffs[c][row + na_pad:row + 2 * na_pad] for c in range(3))
        cos = _dot3(b1, b2) * lax.rsqrt(_dot3(b1, b1) * _dot3(b2, b2))
        cos = jnp.clip(cos, -1.0, 1.0)
        # TODO(synk): cgnet convention assumed: angle between (x1-x0) and (x2-x1).
        ang = jnp.arccos(cos) if acos_in_kernel else cos
        o_ref[out:out + na_pad] = ang.astype(o_ref.dtype)
        row += 2 * na_pad
        out += na_pad

    if nq_pad:                                   # four-bead dihedral cos / sin
        b1 = tuple(diffs[c][row:row + nq_pad] for c in range(3))
        b2 = tuple(diffs[c][row + nq_pad:row + 2 * nq_pad] for c in range(3))
        b3 = tuple(diffs[c][row + 2 * nq_pad:row + 3 * nq_pad] for c in range(3))
        n1 = _cross3(b1, b2)
        n2 = _cross3(b2, b3)
        m = _cross3(n2, b2)
        inv_n1 = lax.rsqrt(_dot3(n1, n1))
        o_ref[out:out + nq_pad] = (
            _dot3(n1, n2) * inv_n1 * lax.rsqrt(_dot3(n2, n2))).astype(o_ref.dtype)
        o_ref[out + nq_pad:out + 2 * nq_pad] = (
            _dot3(n1, m) * inv_n1 * lax.rsqrt(_dot3(m, m))).astype(o_ref.dtype)


# ----------------------------------------------------------------------------
# One-time, compile-only probe: does jnp.arccos lower inside a Mosaic kernel?
# ----------------------------------------------------------------------------
_ACOS_IN_KERNEL = None


def _acos_in_kernel_supported():
    global _ACOS_IN_KERNEL
    if _ACOS_IN_KERNEL is None:
        def _probe(x_ref, o_ref):
            o_ref[...] = jnp.arccos(jnp.clip(x_ref[...], -1.0, 1.0))
        try:
            fn = pl.pallas_call(
                _probe, out_shape=jax.ShapeDtypeStruct((_SUBLANE, _LANE), jnp.float32))
            jax.jit(fn).lower(
                jax.ShapeDtypeStruct((_SUBLANE, _LANE), jnp.float32)).compile()
            _ACOS_IN_KERNEL = True
        except Exception:
            # TODO(synk): no in-kernel arccos lowering on this Mosaic build; the tiny
            # elementwise arccos runs in the jitted wrapper instead.
            _ACOS_IN_KERNEL = False
    return _ACOS_IN_KERNEL


# ----------------------------------------------------------------------------
# Jitted forward builder (baked per feature-tuple set)
# ----------------------------------------------------------------------------
def _build_forward(pairs, trips, quads, acos_in_kernel):
    pairs = tuple(tuple(int(i) for i in p) for p in pairs)
    trips = tuple(tuple(int(i) for i in t) for t in trips)
    quads = tuple(tuple(int(i) for i in q) for q in quads)
    nd, na, nq = len(pairs), len(trips), len(quads)
    nd_pad = _round_up(nd, _SUBLANE) if nd else 0
    na_pad = _round_up(na, _SUBLANE) if na else 0
    nq_pad = _round_up(nq, _SUBLANE) if nq else 0
    n_out_pad = nd_pad + na_pad + 2 * nq_pad
    n_rows = nd_pad + 2 * na_pad + 3 * nq_pad

    kernel = functools.partial(_geometry_kernel, nd_pad=nd_pad, na_pad=na_pad,
                               nq_pad=nq_pad, acos_in_kernel=acos_in_kernel)

    @jax.jit
    def forward_slab(coords):                    # [3, n_beads, n_frames]
        _, n_beads, n_frames = coords.shape
        dmat = jnp.asarray(
            _build_diff_matrix(pairs, trips, quads, n_beads, nd_pad, na_pad, nq_pad))
        vmem_limit, vmem_budget = _vmem_limits()
        # Per-frame VMEM bytes: double-buffered in/out blocks + 3 MXU diff slabs
        # + live elementwise temporaries (generous estimate).
        per_frame_f32 = (2 * 3 * n_beads + 2 * n_out_pad + 3 * n_rows
                         + 3 * nd_pad + 8 * na_pad + 16 * nq_pad + 64)
        n_pad, tile = _frame_tiling(n_frames, 4 * per_frame_f32, vmem_budget)
        if n_pad != n_frames:
            # edge padding keeps padded lanes finite; they are sliced off below
            coords = jnp.pad(coords, ((0, 0), (0, 0), (0, n_pad - n_frames)),
                             mode="edge")
        slab = pl.pallas_call(
            kernel,
            out_shape=jax.ShapeDtypeStruct((n_out_pad, n_pad), coords.dtype),
            grid=(n_pad // tile,),
            in_specs=[
                pl.BlockSpec((n_rows, n_beads), lambda i: (0, 0)),
                pl.BlockSpec((3, n_beads, tile), lambda i: (0, 0, i)),
            ],
            out_specs=pl.BlockSpec((n_out_pad, tile), lambda i: (0, i)),
            compiler_params=pltpu.CompilerParams(
                dimension_semantics=("parallel",),
                vmem_limit_bytes=vmem_limit),
        )(dmat, coords)
        slab = slab[:, :n_frames]
        pieces = []
        if nd:
            pieces.append(slab[:nd])
        if na:
            ang = slab[nd_pad:nd_pad + na]
            if not acos_in_kernel:
                ang = jnp.arccos(ang)
            pieces.append(ang)
        if nq:
            base = nd_pad + na_pad
            pieces.append(slab[base:base + nq])
            pieces.append(slab[base + nq_pad:base + nq_pad + nq])
        return pieces[0] if len(pieces) == 1 else jnp.concatenate(pieces, axis=0)

    @jax.jit
    def forward(data):                           # [n_frames, n_beads, 3]
        coords = jnp.transpose(data, (2, 1, 0))  # lane-dense: frames on lanes
        return jnp.transpose(forward_slab(coords), (1, 0))

    return forward, forward_slab


# ----------------------------------------------------------------------------
# Module equivalent
# ----------------------------------------------------------------------------
class GeometryFeaturePallas:
    """JAX/Pallas reimplementation of cgnet GeometryFeature.forward."""

    def __init__(self, feature_tuples=None, n_beads=None):
        self._n_beads = n_beads
        if feature_tuples != "all_backbone":
            if feature_tuples is None:
                raise RuntimeError(
                    "Either a list of feature tuples or 'all_backbone' must be specified.")
            _temp = dict(zip(feature_tuples, np.arange(len(feature_tuples))))
            if len(_temp) < len(feature_tuples):
                feature_tuples = list(_temp.keys())
                warnings.warn("Some feature tuples are repeated and have been removed.")
            lens = [len(f) for f in feature_tuples]
            if min(lens) < 2 or max(lens) > 4:
                raise ValueError("Custom features must be tuples of length 2, 3, or 4.")
            self.feature_tuples = feature_tuples
            self._distance_pairs = [f for f in feature_tuples if len(f) == 2]
            self._angle_trips = [f for f in feature_tuples if len(f) == 3]
            self._dihedral_quads = [f for f in feature_tuples if len(f) == 4]
        else:
            if n_beads is None:
                raise RuntimeError("Must specify n_beads if feature_tuples is 'all_backbone'.")
            # Geometry.get_distance_indices ordering: by index increment, then start bead
            pairs = []
            for inc in range(1, n_beads):
                for i in range(n_beads - inc):
                    pairs.append((i, i + inc))
            self._distance_pairs = pairs
            self._angle_trips = (
                [(i, i + 1, i + 2) for i in range(n_beads - 2)] if n_beads > 2 else [])
            self._dihedral_quads = (
                [(i, i + 1, i + 2, i + 3) for i in range(n_beads - 3)] if n_beads > 3 else [])
            self.feature_tuples = self._distance_pairs + self._angle_trips + self._dihedral_quads

        acos_ok = _acos_in_kernel_supported() if self._angle_trips else True
        self._forward, self._forward_slab = _build_forward(
            self._distance_pairs, self._angle_trips, self._dihedral_quads, acos_ok)

    def forward_lane_major(self, coords):
        """coords: [3, n_beads, n_frames] -> lane-dense [n_features, n_frames] slab
        (skips the HBM transposes of the PyTorch-layout path)."""
        return self._forward_slab(jnp.asarray(coords))

    def __call__(self, data):
        # data: [n_frames, n_beads, 3]
        data = jnp.asarray(data)
        n_frames, n_beads = data.shape[0], data.shape[1]
        if self._n_beads is not None and n_beads != self._n_beads:
            raise ValueError("n_beads passed to __init__ does not match n_beads in data.")
        if self.feature_tuples and max(max(f) for f in self.feature_tuples) > n_beads - 1:
            raise ValueError("Bead index in at least one feature is out of range.")
        self.n_beads = n_beads

        self.descriptions = {}
        self.description_order = []
        empty = jnp.zeros((n_frames, 0), dtype=data.dtype)
        if not self.feature_tuples:
            self.distances = self.angles = empty
            self.dihedral_cosines = self.dihedral_sines = empty
            return empty

        out = self._forward(data)

        nd = len(self._distance_pairs)
        na = len(self._angle_trips)
        nh = len(self._dihedral_quads)
        k = 0
        if nd:
            self.distances = out[:, :nd]
            self.descriptions["Distances"] = self._distance_pairs
            self.description_order.append("Distances")
            k = nd
        else:
            self.distances = empty
        if na:
            self.angles = out[:, k:k + na]
            self.descriptions["Angles"] = self._angle_trips
            self.description_order.append("Angles")
            k += na
        else:
            self.angles = empty
        if nh:
            self.dihedral_cosines = out[:, k:k + nh]
            self.dihedral_sines = out[:, k + nh:k + 2 * nh]
            self.descriptions["Dihedral_cosines"] = self._dihedral_quads
            self.descriptions["Dihedral_sines"] = self._dihedral_quads
            self.description_order += ["Dihedral_cosines", "Dihedral_sines"]
        else:
            self.dihedral_cosines = empty
            self.dihedral_sines = empty
        return out


# ----------------------------------------------------------------------------
# Pure-JAX reference (verification only)
# ----------------------------------------------------------------------------
def _reference_forward(data, pairs, trips, quads):
    outs = []
    if pairs:
        p = np.asarray(pairs)
        v = data[:, p[:, 1], :] - data[:, p[:, 0], :]
        outs.append(jnp.sqrt(jnp.sum(v * v, axis=-1)))
    if trips:
        t = np.asarray(trips)
        b1 = data[:, t[:, 1], :] - data[:, t[:, 0], :]
        b2 = data[:, t[:, 2], :] - data[:, t[:, 1], :]
        cos = jnp.sum(b1 * b2, -1) / (jnp.linalg.norm(b1, axis=-1) * jnp.linalg.norm(b2, axis=-1))
        outs.append(jnp.arccos(jnp.clip(cos, -1.0, 1.0)))
    if quads:
        q = np.asarray(quads)
        b1 = data[:, q[:, 1], :] - data[:, q[:, 0], :]
        b2 = data[:, q[:, 2], :] - data[:, q[:, 1], :]
        b3 = data[:, q[:, 3], :] - data[:, q[:, 2], :]
        n1 = jnp.cross(b1, b2)
        n2 = jnp.cross(b2, b3)
        m = jnp.cross(n2, b2)
        nrm = lambda x: jnp.linalg.norm(x, axis=-1)
        outs.append(jnp.sum(n1 * n2, -1) / (nrm(n1) * nrm(n2)))
        outs.append(jnp.sum(n1 * m, -1) / (nrm(n1) * nrm(m)))
    return jnp.concatenate(outs, axis=1)


if __name__ == "__main__":
    n_beads = 8
    feat = GeometryFeaturePallas(feature_tuples="all_backbone", n_beads=n_beads)

    n_dist = n_beads * (n_beads - 1) // 2       # 28
    n_ang = n_beads - 2                         # 6
    n_dih = n_beads - 3                         # 5
    n_feat = n_dist + n_ang + 2 * n_dih         # 44

    # Small case: frames < one lane tile (padding path, grid = 1)
    data = jax.random.normal(jax.random.PRNGKey(0), (8, n_beads, 3), dtype=jnp.float32)
    out = jax.block_until_ready(feat(data))
    assert out.shape == (8, n_feat), out.shape
    ref = _reference_forward(data, feat._distance_pairs, feat._angle_trips,
                             feat._dihedral_quads)
    np.testing.assert_allclose(np.asarray(out), np.asarray(ref), rtol=5e-5, atol=5e-5)

    # Larger, non-multiple-of-128 frame count: edge padding, VMEM-budgeted
    # frame tiles, and a multi-step 'parallel' grid (both TCs on v7x).
    data2 = jax.random.normal(jax.random.PRNGKey(0), (1000, n_beads, 3), dtype=jnp.float32)
    out2 = jax.block_until_ready(feat(data2))
    assert out2.shape == (1000, n_feat), out2.shape
    ref2 = _reference_forward(data2, feat._distance_pairs, feat._angle_trips,
                              feat._dihedral_quads)
    np.testing.assert_allclose(np.asarray(out2), np.asarray(ref2), rtol=5e-5, atol=5e-5)

    # Lane-major path (no wrapper transposes) must agree with the default path.
    slab = jax.block_until_ready(
        feat.forward_lane_major(jnp.transpose(data2, (2, 1, 0))))
    assert slab.shape == (n_feat, 1000), slab.shape
    np.testing.assert_allclose(np.asarray(slab), np.asarray(out2).T,
                               rtol=1e-6, atol=1e-6)

    # Custom (non-backbone) feature tuples: mixed, arbitrary bead indices.
    feat2 = GeometryFeaturePallas(
        feature_tuples=[(0, 1), (2, 5), (4, 7), (0, 3, 7), (1, 2, 4, 6), (0, 2, 5, 7)])
    out3 = jax.block_until_ready(feat2(data))
    assert out3.shape == (8, 3 + 1 + 2 * 2), out3.shape
    ref3 = _reference_forward(data, feat2._distance_pairs, feat2._angle_trips,
                              feat2._dihedral_quads)
    np.testing.assert_allclose(np.asarray(out3), np.asarray(ref3), rtol=5e-5, atol=5e-5)

    print("KERNEL_OK")
</pallas_src>

<mosaic_0001>
module attributes {stable_mosaic.version = 11 : i64} {
  func.func @_geometry_kernel(%arg0: i32, %arg1: memref<72x8xf32, #tpu.memory_space<vmem>>, %arg2: memref<3x8x128xf32, #tpu.memory_space<vmem>>, %arg3: memref<56x128xf32, #tpu.memory_space<vmem>>) attributes {dimension_semantics = [#tpu.dimension_semantics<parallel>], iteration_bounds = array<i64: 1>, scalar_prefetch = 0 : i64, scratch_operands = 0 : i64, tpu.core_type = #tpu.core_type<tc>, window_params = [{pipeline_mode = #tpu.pipeline_mode<synchronous>, transform_indices = @transform_0, window_bounds = array<i64: 72, 8>}, {transform_indices = @transform_1, window_bounds = array<i64: 3, 8, 128>}, {transform_indices = @transform_2, window_bounds = array<i64: 56, 128>}]} {
    %c0 = arith.constant 0 : index
    %c0_0 = arith.constant 0 : index
    %0 = vector.load %arg1[%c0, %c0_0] : memref<72x8xf32, #tpu.memory_space<vmem>>, vector<72x8xf32>
    %c0_1 = arith.constant 0 : index
    %c0_2 = arith.constant 0 : index
    %c0_3 = arith.constant 0 : index
    %1 = vector.load %arg2[%c0_1, %c0_2, %c0_3] : memref<3x8x128xf32, #tpu.memory_space<vmem>>, vector<1x8x128xf32>
    %2 = vector.shape_cast %1 : vector<1x8x128xf32> to vector<8x128xf32>
    %cst = arith.constant dense<0.000000e+00> : vector<72x128xf32>
    %3 = tpu.matmul %0, %2, %cst {dimension_numbers = #tpu.dot_dimension_numbers<[1], [0], [0], [1], [0, 0, 1, 1], [], []>, precision = #tpu.contract_precision<fp32>} : vector<72x8xf32>, vector<8x128xf32>, vector<72x128xf32> -> vector<72x128xf32>
    %c1 = arith.constant 1 : index
    %c0_4 = arith.constant 0 : index
    %c0_5 = arith.constant 0 : index
    %4 = vector.load %arg2[%c1, %c0_4, %c0_5] : memref<3x8x128xf32, #tpu.memory_space<vmem>>, vector<1x8x128xf32>
    %5 = vector.shape_cast %4 : vector<1x8x128xf32> to vector<8x128xf32>
    %cst_6 = arith.constant dense<0.000000e+00> : vector<72x128xf32>
    %6 = tpu.matmul %0, %5, %cst_6 {dimension_numbers = #tpu.dot_dimension_numbers<[1], [0], [0], [1], [0, 0, 1, 1], [], []>, precision = #tpu.contract_precision<fp32>} : vector<72x8xf32>, vector<8x128xf32>, vector<72x128xf32> -> vector<72x128xf32>
    %c2 = arith.constant 2 : index
    %c0_7 = arith.constant 0 : index
    %c0_8 = arith.constant 0 : index
    %7 = vector.load %arg2[%c2, %c0_7, %c0_8] : memref<3x8x128xf32, #tpu.memory_space<vmem>>, vector<1x8x128xf32>
    %8 = vector.shape_cast %7 : vector<1x8x128xf32> to vector<8x128xf32>
    %cst_9 = arith.constant dense<0.000000e+00> : vector<72x128xf32>
    %9 = tpu.matmul %0, %8, %cst_9 {dimension_numbers = #tpu.dot_dimension_numbers<[1], [0], [0], [1], [0, 0, 1, 1], [], []>, precision = #tpu.contract_precision<fp32>} : vector<72x8xf32>, vector<8x128xf32>, vector<72x128xf32> -> vector<72x128xf32>
    %10 = vector.extract_strided_slice %3 {offsets = [0, 0], sizes = [32, 128], strides = [1, 1]} : vector<72x128xf32> to vector<32x128xf32>
    %11 = arith.mulf %10, %10 : vector<32x128xf32>
    %12 = vector.extract_strided_slice %6 {offsets = [0, 0], sizes = [32, 128], strides = [1, 1]} : vector<72x128xf32> to vector<32x128xf32>
    %13 = arith.mulf %12, %12 : vector<32x128xf32>
    %14 = arith.addf %11, %13 : vector<32x128xf32>
    %15 = vector.extract_strided_slice %9 {offsets = [0, 0], sizes = [32, 128], strides = [1, 1]} : vector<72x128xf32> to vector<32x128xf32>
    %16 = arith.mulf %15, %15 : vector<32x128xf32>
    %17 = arith.addf %14, %16 : vector<32x128xf32>
    %18 = math.sqrt %17 : vector<32x128xf32>
    %c0_10 = arith.constant 0 : index
    %c0_11 = arith.constant 0 : index
    %19 = vector.load %arg3[%c0_10, %c0_11] : memref<56x128xf32, #tpu.memory_space<vmem>>, vector<32x128xf32>
    tpu.vector_store %arg3[%c0_10, %c0_11], %18 {strides = array<i32>} : memref<56x128xf32, #tpu.memory_space<vmem>>, vector<32x128xf32>,
    %20 = vector.extract_strided_slice %3 {offsets = [32, 0], sizes = [8, 128], strides = [1, 1]} : vector<72x128xf32> to vector<8x128xf32>
    %21 = vector.extract_strided_slice %6 {offsets = [32, 0], sizes = [8, 128], strides = [1, 1]} : vector<72x128xf32> to vector<8x128xf32>
    %22 = vector.extract_strided_slice %9 {offsets = [32, 0], sizes = [8, 128], strides = [1, 1]} : vector<72x128xf32> to vector<8x128xf32>
    %23 = vector.extract_strided_slice %3 {offsets = [40, 0], sizes = [8, 128], strides = [1, 1]} : vector<72x128xf32> to vector<8x128xf32>
    %24 = vector.extract_strided_slice %6 {offsets = [40, 0], sizes = [8, 128], strides = [1, 1]} : vector<72x128xf32> to vector<8x128xf32>
    %25 = vector.extract_strided_slice %9 {offsets = [40, 0], sizes = [8, 128], strides = [1, 1]} : vector<72x128xf32> to vector<8x128xf32>
    %26 = arith.mulf %20, %23 : vector<8x128xf32>
    %27 = arith.mulf %21, %24 : vector<8x128xf32>
    %28 = arith.addf %26, %27 : vector<8x128xf32>
    %29 = arith.mulf %22, %25 : vector<8x128xf32>
    %30 = arith.addf %28, %29 : vector<8x128xf32>
    %31 = arith.mulf %20, %20 : vector<8x128xf32>
    %32 = arith.mulf %21, %21 : vector<8x128xf32>
    %33 = arith.addf %31, %32 : vector<8x128xf32>
    %34 = arith.mulf %22, %22 : vector<8x128xf32>
    %35 = arith.addf %33, %34 : vector<8x128xf32>
    %36 = arith.mulf %23, %23 : vector<8x128xf32>
    %37 = arith.mulf %24, %24 : vector<8x128xf32>
    %38 = arith.addf %36, %37 : vector<8x128xf32>
    %39 = arith.mulf %25, %25 : vector<8x128xf32>
    %40 = arith.addf %38, %39 : vector<8x128xf32>
    %41 = arith.mulf %35, %40 : vector<8x128xf32>
    %42 = math.rsqrt %41 : vector<8x128xf32>
    %43 = arith.mulf %30, %42 : vector<8x128xf32>
    %cst_12 = arith.constant -1.000000e+00 : f32
    %cst_13 = arith.constant 1.000000e+00 : f32
    %44 = vector.broadcast %cst_12 : f32 to vector<8x128xf32>
    %45 = arith.maximumf %44, %43 : vector<8x128xf32>
    %46 = vector.broadcast %cst_13 : f32 to vector<8x128xf32>
    %47 = arith.minimumf %46, %45 : vector<8x128xf32>
    %c32 = arith.constant 32 : index
    %c0_14 = arith.constant 0 : index
    %48 = vector.load %arg3[%c32, %c0_14] : memref<56x128xf32, #tpu.memory_space<vmem>>, vector<8x128xf32>
    tpu.vector_store %arg3[%c32, %c0_14], %47 {strides = array<i32>} : memref<56x128xf32, #tpu.memory_space<vmem>>, vector<8x128xf32>,
    %49 = vector.extract_strided_slice %3 {offsets = [48, 0], sizes = [8, 128], strides = [1, 1]} : vector<72x128xf32> to vector<8x128xf32>
    %50 = vector.extract_strided_slice %6 {offsets = [48, 0], sizes = [8, 128], strides = [1, 1]} : vector<72x128xf32> to vector<8x128xf32>
    %51 = vector.extract_strided_slice %9 {offsets = [48, 0], sizes = [8, 128], strides = [1, 1]} : vector<72x128xf32> to vector<8x128xf32>
    %52 = vector.extract_strided_slice %3 {offsets = [56, 0], sizes = [8, 128], strides = [1, 1]} : vector<72x128xf32> to vector<8x128xf32>
    %53 = vector.extract_strided_slice %6 {offsets = [56, 0], sizes = [8, 128], strides = [1, 1]} : vector<72x128xf32> to vector<8x128xf32>
    %54 = vector.extract_strided_slice %9 {offsets = [56, 0], sizes = [8, 128], strides = [1, 1]} : vector<72x128xf32> to vector<8x128xf32>
    %55 = vector.extract_strided_slice %3 {offsets = [64, 0], sizes = [8, 128], strides = [1, 1]} : vector<72x128xf32> to vector<8x128xf32>
    %56 = vector.extract_strided_slice %6 {offsets = [64, 0], sizes = [8, 128], strides = [1, 1]} : vector<72x128xf32> to vector<8x128xf32>
    %57 = vector.extract_strided_slice %9 {offsets = [64, 0], sizes = [8, 128], strides = [1, 1]} : vector<72x128xf32> to vector<8x128xf32>
    %58 = arith.mulf %50, %54 : vector<8x128xf32>
    %59 = arith.mulf %51, %53 : vector<8x128xf32>
    %60 = arith.subf %58, %59 : vector<8x128xf32>
    %61 = arith.mulf %51, %52 : vector<8x128xf32>
    %62 = arith.mulf %49, %54 : vector<8x128xf32>
    %63 = arith.subf %61, %62 : vector<8x128xf32>
    %64 = arith.mulf %49, %53 : vector<8x128xf32>
    %65 = arith.mulf %50, %52 : vector<8x128xf32>
    %66 = arith.subf %64, %65 : vector<8x128xf32>
    %67 = arith.mulf %53, %57 : vector<8x128xf32>
    %68 = arith.mulf %54, %56 : vector<8x128xf32>
    %69 = arith.subf %67, %68 : vector<8x128xf32>
    %70 = arith.mulf %54, %55 : vector<8x128xf32>
    %71 = arith.mulf %52, %57 : vector<8x128xf32>
    %72 = arith.subf %70, %71 : vector<8x128xf32>
    %73 = arith.mulf %52, %56 : vector<8x128xf32>
    %74 = arith.mulf %53, %55 : vector<8x128xf32>
    %75 = arith.subf %73, %74 : vector<8x128xf32>
    %76 = arith.mulf %72, %54 : vector<8x128xf32>
    %77 = arith.mulf %75, %53 : vector<8x128xf32>
    %78 = arith.subf %76, %77 : vector<8x128xf32>
    %79 = arith.mulf %75, %52 : vector<8x128xf32>
    %80 = arith.mulf %69, %54 : vector<8x128xf32>
    %81 = arith.subf %79, %80 : vector<8x128xf32>
    %82 = arith.mulf %69, %53 : vector<8x128xf32>
    %83 = arith.mulf %72, %52 : vector<8x128xf32>
    %84 = arith.subf %82, %83 : vector<8x128xf32>
    %85 = arith.mulf %60, %60 : vector<8x128xf32>
    %86 = arith.mulf %63, %63 : vector<8x128xf32>
    %87 = arith.addf %85, %86 : vector<8x128xf32>
    %88 = arith.mulf %66, %66 : vector<8x128xf32>
    %89 = arith.addf %87, %88 : vector<8x128xf32>
    %90 = math.rsqrt %89 : vector<8x128xf32>
    %91 = arith.mulf %60, %69 : vector<8x128xf32>
    %92 = arith.mulf %63, %72 : vector<8x128xf32>
    %93 = arith.addf %91, %92 : vector<8x128xf32>
    %94 = arith.mulf %66, %75 : vector<8x128xf32>
    %95 = arith.addf %93, %94 : vector<8x128xf32>
    %96 = arith.mulf %95, %90 : vector<8x128xf32>
    %97 = arith.mulf %69, %69 : vector<8x128xf32>
    %98 = arith.mulf %72, %72 : vector<8x128xf32>
    %99 = arith.addf %97, %98 : vector<8x128xf32>
    %100 = arith.mulf %75, %75 : vector<8x128xf32>
    %101 = arith.addf %99, %100 : vector<8x128xf32>
    %102 = math.rsqrt %101 : vector<8x128xf32>
    %103 = arith.mulf %96, %102 : vector<8x128xf32>
    %c40 = arith.constant 40 : index
    %c0_15 = arith.constant 0 : index
    %104 = vector.load %arg3[%c40, %c0_15] : memref<56x128xf32, #tpu.memory_space<vmem>>, vector<8x128xf32>
    tpu.vector_store %arg3[%c40, %c0_15], %103 {strides = array<i32>} : memref<56x128xf32, #tpu.memory_space<vmem>>, vector<8x128xf32>,
    %105 = arith.mulf %60, %78 : vector<8x128xf32>
    %106 = arith.mulf %63, %81 : vector<8x128xf32>
    %107 = arith.addf %105, %106 : vector<8x128xf32>
    %108 = arith.mulf %66, %84 : vector<8x128xf32>
    %109 = arith.addf %107, %108 : vector<8x128xf32>
    %110 = arith.mulf %109, %90 : vector<8x128xf32>
    %111 = arith.mulf %78, %78 : vector<8x128xf32>
    %112 = arith.mulf %81, %81 : vector<8x128xf32>
    %113 = arith.addf %111, %112 : vector<8x128xf32>
    %114 = arith.mulf %84, %84 : vector<8x128xf32>
    %115 = arith.addf %113, %114 : vector<8x128xf32>
    %116 = math.rsqrt %115 : vector<8x128xf32>
    %117 = arith.mulf %110, %116 : vector<8x128xf32>
    %c48 = arith.constant 48 : index
    %c0_16 = arith.constant 0 : index
    %118 = vector.load %arg3[%c48, %c0_16] : memref<56x128xf32, #tpu.memory_space<vmem>>, vector<8x128xf32>
    tpu.vector_store %arg3[%c48, %c0_16], %117 {strides = array<i32>} : memref<56x128xf32, #tpu.memory_space<vmem>>, vector<8x128xf32>,
    return
  }
  func.func @transform_0(%arg0: i32) -> (i32, i32) {
    %c0_i32 = arith.constant 0 : i32
    %c0_i32_0 = arith.constant 0 : i32
    %c0_i32_1 = arith.constant 0 : i32
    return %c0_i32, %c0_i32_0 : i32, i32
  }
  func.func @transform_1(%arg0: i32) -> (i32, i32, i32) {
    %c0_i32 = arith.constant 0 : i32
    %c0_i32_0 = arith.constant 0 : i32
    %c0_i32_1 = arith.constant 0 : i32
    return %c0_i32, %c0_i32_0, %arg0 : i32, i32, i32
  }
  func.func @transform_2(%arg0: i32) -> (i32, i32) {
    %c0_i32 = arith.constant 0 : i32
    %c0_i32_0 = arith.constant 0 : i32
    return %c0_i32, %arg0 : i32, i32
  }
}

</mosaic_0001>

<llo_original>
// kernel: forward_slab.1
$region0: #{forward_slab.1}
  #allocation0 [shape = 'u32[]', space=smem, size = 0x4, offset = 0x4, fixed_abs, tag = 'smem constant byte address 0x4 - core index']
  #allocation1 [shape = 'u32[72,128]{1,0:T(1,128)}', space=vmem, size = 0x9000, scoped, tag = 'internal scratch']
  %s0 = inlined_call_operand.vmem [shape: f32[72,8], index: 0, kind: input, shape index: {}]
  %s1 = inlined_call_operand.vmem [shape: f32[3,8,128], index: 1, kind: input, shape index: {}]
  %s2 = inlined_call_operand.vmem [shape: f32[56,128], index: 2, kind: output, shape index: {}]
  %s3 = sld [smem:[#allocation0]]
  $region18: #{forward_slab.1} parent=0
    _
  %s5 = ssub.s32 1, %s3
  %s6 = scalar_select 0, %s5, %s3
  // Predicated region
  $region2: #{forward_slab.1} parent=0 // pred_check
    _
  $region3: #{forward_slab.1} parent=0 // pred_check_branch
    %8 = sbr.rel (0) target = $region5
  $region4: #{forward_slab.1} parent=0 // pred_region
    _
  $region5: #{forward_slab.1} parent=0 // pred_fallthru
    _
  // Predicated region
  $region6: #{forward_slab.1} parent=0 // pred_check
    _
  $region7: #{forward_slab.1} parent=0 // pred_check_branch
    %10 = sbr.rel (0) target = $region9
  $region8: #{forward_slab.1} parent=0 // pred_region
    _
  $region9: #{forward_slab.1} parent=0 // pred_fallthru
    _
  %v11 = vld [vmem:[%s0] sm:$0xff]
  %v12 = vld [vmem:[%s0 + $0x8] sm:$0xff]
  %v13 = vld [vmem:[%s0 + $0x10] sm:$0xff]
  %v14 = vld [vmem:[%s0 + $0x18] sm:$0xff]
  %v15 = vld [vmem:[%s0 + $0x20] sm:$0xff]
  %v16 = vld [vmem:[%s0 + $0x28] sm:$0xff]
  %v17 = vld [vmem:[%s0 + $0x30] sm:$0xff]
  %v18 = vld [vmem:[%s0 + $0x38] sm:$0xff]
  %v19 = vld [vmem:[%s0 + $0x40] sm:$0xff]
  %v20 = vld [vmem:[%s1] sm:$0xff]
  %vm21 = vcmask 64512
  %v23 = vsel %vm21, %v11, 0
  %v26 = vsel %vm21, %v12, 0
  %v29 = vsel %vm21, %v13, 0
  %v32 = vsel %vm21, %v14, 0
  %v35 = vsel %vm21, %v15, 0
  %v38 = vsel %vm21, %v16, 0
  %v41 = vsel %vm21, %v17, 0
  %v44 = vsel %vm21, %v18, 0
  %v47 = vsel %vm21, %v19, 0
  %49 = vmatpush.msra.mxu0 0.0
  %50 = vmatpush.msra.mxu0 0.0
  %51 = vmatpush.msra.mxu0 0.0
  %52 = vmatpush.msra.mxu0 0.0
  %53 = vmatpush.msra.mxu0 0.0
  %54 = vmatpush.msra.mxu0 0.0
  %55 = vmatpush.msra.mxu0 0.0
  %56 = vmatpush.msra.mxu0 0.0
  %57 = vmatpush.msra.mxu0 0.0
  %58 = vmatpush.msra.mxu0 0.0
  %59 = vmatpush.msra.mxu0 0.0
  %60 = vmatpush.msra.mxu0 0.0
  %61 = vmatpush.msra.mxu0 0.0
  %62 = vmatpush.msra.mxu0 0.0
  %63 = vmatpush.msra.mxu0 0.0
  %v64 = vand.u32 %v20, 4294901760
  %65 = vmatpush.msra.mxu0 %v64
  %v66 = vand.u32 %v23, 4294901760
  %v67 = vsub.f32 %v23, %v66
  %v68 = vand.u32 %v67, 4294901760
  %v69 = vsub.f32 %v67, %v68
  %v70 = vand.u32 %v69, 4294901760
  %71 = vmatmul.f32.gmra.mxu0 %v70
  %v72 = vpop.f32.mrf.mxu0
  %v73 = vadd.f32 0.0, %v72
  %v74 = vand.u32 %v26, 4294901760
  %v75 = vsub.f32 %v26, %v74
  %v76 = vand.u32 %v75, 4294901760
  %v77 = vsub.f32 %v75, %v76
  %v78 = vand.u32 %v77, 4294901760
  %79 = vmatmul.f32.gmra.mxu0 %v78
  %v80 = vpop.f32.mrf.mxu0
  %v81 = vadd.f32 0.0, %v80
  %v82 = vand.u32 %v29, 4294901760
  %v83 = vsub.f32 %v29, %v82
  %v84 = vand.u32 %v83, 4294901760
  %v85 = vsub.f32 %v83, %v84
  %v86 = vand.u32 %v85, 4294901760
  %87 = vmatmul.f32.gmra.mxu0 %v86
  %v88 = vpop.f32.mrf.mxu0
  %v89 = vadd.f32 0.0, %v88
  %v90 = vand.u32 %v32, 4294901760
  %v91 = vsub.f32 %v32, %v90
  %v92 = vand.u32 %v91, 4294901760
  %v93 = vsub.f32 %v91, %v92
  %v94 = vand.u32 %v93, 4294901760
  %95 = vmatmul.f32.gmra.mxu0 %v94
  %v96 = vpop.f32.mrf.mxu0
  %v97 = vadd.f32 0.0, %v96
  %v98 = vand.u32 %v35, 4294901760
  %v99 = vsub.f32 %v35, %v98
  %v100 = vand.u32 %v99, 4294901760
  %v101 = vsub.f32 %v99, %v100
  %v102 = vand.u32 %v101, 4294901760
  %103 = vmatmul.f32.gmra.mxu0 %v102
  %v104 = vpop.f32.mrf.mxu0
  %v105 = vadd.f32 0.0, %v104
  %v106 = vand.u32 %v38, 4294901760
  %v107 = vsub.f32 %v38, %v106
  %v108 = vand.u32 %v107, 4294901760
  %v109 = vsub.f32 %v107, %v108
  %v110 = vand.u32 %v109, 4294901760
  %111 = vmatmul.f32.gmra.mxu0 %v110
  %v112 = vpop.f32.mrf.mxu0
  %v113 = vadd.f32 0.0, %v112
  %v114 = vand.u32 %v41, 4294901760
  %v115 = vsub.f32 %v41, %v114
  %v116 = vand.u32 %v115, 4294901760
  %v117 = vsub.f32 %v115, %v116
  %v118 = vand.u32 %v117, 4294901760
  %119 = vmatmul.f32.gmra.mxu0 %v118
  %v120 = vpop.f32.mrf.mxu0
  %v121 = vadd.f32 0.0, %v120
  %v122 = vand.u32 %v44, 4294901760
  %v123 = vsub.f32 %v44, %v122
  %v124 = vand.u32 %v123, 4294901760
  %v125 = vsub.f32 %v123, %v124
  %v126 = vand.u32 %v125, 4294901760
  %127 = vmatmul.f32.gmra.mxu0 %v126
  %v128 = vpop.f32.mrf.mxu0
  %v129 = vadd.f32 0.0, %v128
  %v130 = vand.u32 %v47, 4294901760
  %v131 = vsub.f32 %v47, %v130
  %v132 = vand.u32 %v131, 4294901760
  %v133 = vsub.f32 %v131, %v132
  %v134 = vand.u32 %v133, 4294901760
  %135 = vmatmul.f32.gmra.mxu0 %v134
  %v136 = vpop.f32.mrf.mxu0
  %v137 = vadd.f32 0.0, %v136
  %138 = vdwg.mxu0
  %139 = vmatpush.msra.mxu0 0.0
  %140 = vmatpush.msra.mxu0 0.0
  %141 = vmatpush.msra.mxu0 0.0
  %142 = vmatpush.msra.mxu0 0.0
  %143 = vmatpush.msra.mxu0 0.0
  %144 = vmatpush.msra.mxu0 0.0
  %145 = vmatpush.msra.mxu0 0.0
  %146 = vmatpush.msra.mxu0 0.0
  %147 = vmatpush.msra.mxu0 0.0
  %148 = vmatpush.msra.mxu0 0.0
  %149 = vmatpush.msra.mxu0 0.0
  %150 = vmatpush.msra.mxu0 0.0
  %151 = vmatpush.msra.mxu0 0.0
  %152 = vmatpush.msra.mxu0 0.0
  %153 = vmatpush.msra.mxu0 0.0
  %v154 = vand.u32 %v20, 4294901760
  %v155 = vsub.f32 %v20, %v154
  %v156 = vand.u32 %v155, 4294901760
  %v157 = vsub.f32 %v155, %v156
  %v158 = vand.u32 %v157, 4294901760
  %159 = vmatpush.msra.mxu0 %v158
  %v160 = vand.u32 %v23, 4294901760
  %161 = vmatmul.f32.gmra.mxu0 %v160
  %v162 = vpop.f32.mrf.mxu0
  %v163 = vadd.f32 %v73, %v162
  %v164 = vand.u32 %v26, 4294901760
  %165 = vmatmul.f32.gmra.mxu0 %v164
  %v166 = vpop.f32.mrf.mxu0
  %v167 = vadd.f32 %v81, %v166
  %v168 = vand.u32 %v29, 4294901760
  %169 = vmatmul.f32.gmra.mxu0 %v168
  %v170 = vpop.f32.mrf.mxu0
  %v171 = vadd.f32 %v89, %v170
  %v172 = vand.u32 %v32, 4294901760
  %173 = vmatmul.f32.gmra.mxu0 %v172
  %v174 = vpop.f32.mrf.mxu0
  %v175 = vadd.f32 %v97, %v174
  %v176 = vand.u32 %v35, 4294901760
  %177 = vmatmul.f32.gmra.mxu0 %v176
  %v178 = vpop.f32.mrf.mxu0
  %v179 = vadd.f32 %v105, %v178
  %v180 = vand.u32 %v38, 4294901760
  %181 = vmatmul.f32.gmra.mxu0 %v180
  %v182 = vpop.f32.mrf.mxu0
  %v183 = vadd.f32 %v113, %v182
  %v184 = vand.u32 %v41, 4294901760
  %185 = vmatmul.f32.gmra.mxu0 %v184
  %v186 = vpop.f32.mrf.mxu0
  %v187 = vadd.f32 %v121, %v186
  %v188 = vand.u32 %v44, 4294901760
  %189 = vmatmul.f32.gmra.mxu0 %v188
  %v190 = vpop.f32.mrf.mxu0
  %v191 = vadd.f32 %v129, %v190
  %v192 = vand.u32 %v47, 4294901760
  %193 = vmatmul.f32.gmra.mxu0 %v192
  %v194 = vpop.f32.mrf.mxu0
  %v195 = vadd.f32 %v137, %v194
  %196 = vdwg.mxu0
  %197 = vmatpush.msra.mxu0 0.0
  %198 = vmatpush.msra.mxu0 0.0
  %199 = vmatpush.msra.mxu0 0.0
  %200 = vmatpush.msra.mxu0 0.0
  %201 = vmatpush.msra.mxu0 0.0
  %202 = vmatpush.msra.mxu0 0.0
  %203 = vmatpush.msra.mxu0 0.0
  %204 = vmatpush.msra.mxu0 0.0
  %205 = vmatpush.msra.mxu0 0.0
  %206 = vmatpush.msra.mxu0 0.0
  %207 = vmatpush.msra.mxu0 0.0
  %208 = vmatpush.msra.mxu0 0.0
  %209 = vmatpush.msra.mxu0 0.0
  %210 = vmatpush.msra.mxu0 0.0
  %211 = vmatpush.msra.mxu0 0.0
  %v212 = vand.u32 %v20, 4294901760
  %v213 = vsub.f32 %v20, %v212
  %214 = vmatpush.msra.mxu0 %v213
  %v215 = vand.u32 %v23, 4294901760
  %v216 = vsub.f32 %v23, %v215
  %217 = vmatmul.f32.gmra.mxu0 %v216
  %v218 = vpop.f32.mrf.mxu0
  %v219 = vadd.f32 %v163, %v218
  %v220 = vand.u32 %v26, 4294901760
  %v221 = vsub.f32 %v26, %v220
  %222 = vmatmul.f32.gmra.mxu0 %v221
  %v223 = vpop.f32.mrf.mxu0
  %v224 = vadd.f32 %v167, %v223
  %v225 = vand.u32 %v29, 4294901760
  %v226 = vsub.f32 %v29, %v225
  %227 = vmatmul.f32.gmra.mxu0 %v226
  %v228 = vpop.f32.mrf.mxu0
  %v229 = vadd.f32 %v171, %v228
  %v230 = vand.u32 %v32, 4294901760
  %v231 = vsub.f32 %v32, %v230
  %232 = vmatmul.f32.gmra.mxu0 %v231
  %v233 = vpop.f32.mrf.mxu0
  %v234 = vadd.f32 %v175, %v233
  %v235 = vand.u32 %v35, 4294901760
  %v236 = vsub.f32 %v35, %v235
  %237 = vmatmul.f32.gmra.mxu0 %v236
  %v238 = vpop.f32.mrf.mxu0
  %v239 = vadd.f32 %v179, %v238
  %v240 = vand.u32 %v38, 4294901760
  %v241 = vsub.f32 %v38, %v240
  %242 = vmatmul.f32.gmra.mxu0 %v241
  %v243 = vpop.f32.mrf.mxu0
  %v244 = vadd.f32 %v183, %v243
  %v245 = vand.u32 %v41, 4294901760
  %v246 = vsub.f32 %v41, %v245
  %247 = vmatmul.f32.gmra.mxu0 %v246
  %v248 = vpop.f32.mrf.mxu0
  %v249 = vadd.f32 %v187, %v248
  %v250 = vand.u32 %v44, 4294901760
  %v251 = vsub.f32 %v44, %v250
  %252 = vmatmul.f32.gmra.mxu0 %v251
  %v253 = vpop.f32.mrf.mxu0
  %v254 = vadd.f32 %v191, %v253
  %v255 = vand.u32 %v47, 4294901760
  %v256 = vsub.f32 %v47, %v255
  %257 = vmatmul.f32.gmra.mxu0 %v256
  %v258 = vpop.f32.mrf.mxu0
  %v259 = vadd.f32 %v195, %v258
  %260 = vdwg.mxu0
  %261 = vmatpush.msra.mxu0 0.0
  %262 = vmatpush.msra.mxu0 0.0
  %263 = vmatpush.msra.mxu0 0.0
  %264 = vmatpush.msra.mxu0 0.0
  %265 = vmatpush.msra.mxu0 0.0
  %266 = vmatpush.msra.mxu0 0.0
  %267 = vmatpush.msra.mxu0 0.0
  %268 = vmatpush.msra.mxu0 0.0
  %269 = vmatpush.msra.mxu0 0.0
  %270 = vmatpush.msra.mxu0 0.0
  %271 = vmatpush.msra.mxu0 0.0
  %272 = vmatpush.msra.mxu0 0.0
  %273 = vmatpush.msra.mxu0 0.0
  %274 = vmatpush.msra.mxu0 0.0
  %275 = vmatpush.msra.mxu0 0.0
  %v276 = vand.u32 %v20, 4294901760
  %277 = vmatpush.msra.mxu0 %v276
  %v278 = vand.u32 %v23, 4294901760
  %v279 = vsub.f32 %v23, %v278
  %v280 = vand.u32 %v279, 4294901760
  %281 = vmatmul.f32.gmra.mxu0 %v280
  %v282 = vpop.f32.mrf.mxu0
  %v283 = vadd.f32 %v219, %v282
  %v284 = vand.u32 %v26, 4294901760
  %v285 = vsub.f32 %v26, %v284
  %v286 = vand.u32 %v285, 4294901760
  %287 = vmatmul.f32.gmra.mxu0 %v286
  %v288 = vpop.f32.mrf.mxu0
  %v289 = vadd.f32 %v224, %v288
  %v290 = vand.u32 %v29, 4294901760
  %v291 = vsub.f32 %v29, %v290
  %v292 = vand.u32 %v291, 4294901760
  %293 = vmatmul.f32.gmra.mxu0 %v292
  %v294 = vpop.f32.mrf.mxu0
  %v295 = vadd.f32 %v229, %v294
  %v296 = vand.u32 %v32, 4294901760
  %v297 = vsub.f32 %v32, %v296
  %v298 = vand.u32 %v297, 4294901760
  %299 = vmatmul.f32.gmra.mxu0 %v298
  %v300 = vpop.f32.mrf.mxu0
  %v301 = vadd.f32 %v234, %v300
  %v302 = vand.u32 %v35, 4294901760
  %v303 = vsub.f32 %v35, %v302
  %v304 = vand.u32 %v303, 4294901760
  %305 = vmatmul.f32.gmra.mxu0 %v304
  %v306 = vpop.f32.mrf.mxu0
  %v307 = vadd.f32 %v239, %v306
  %v308 = vand.u32 %v38, 4294901760
  %v309 = vsub.f32 %v38, %v308
  %v310 = vand.u32 %v309, 4294901760
  %311 = vmatmul.f32.gmra.mxu0 %v310
  %v312 = vpop.f32.mrf.mxu0
  %v313 = vadd.f32 %v244, %v312
  %v314 = vand.u32 %v41, 4294901760
  %v315 = vsub.f32 %v41, %v314
  %v316 = vand.u32 %v315, 4294901760
  %317 = vmatmul.f32.gmra.mxu0 %v316
  %v318 = vpop.f32.mrf.mxu0
  %v319 = vadd.f32 %v249, %v318
  %v320 = vand.u32 %v44, 4294901760
  %v321 = vsub.f32 %v44, %v320
  %v322 = vand.u32 %v321, 4294901760
  %323 = vmatmul.f32.gmra.mxu0 %v322
  %v324 = vpop.f32.mrf.mxu0
  %v325 = vadd.f32 %v254, %v324
  %v326 = vand.u32 %v47, 4294901760
  %v327 = vsub.f32 %v47, %v326
  %v328 = vand.u32 %v327, 4294901760
  %329 = vmatmul.f32.gmra.mxu0 %v328
  %v330 = vpop.f32.mrf.mxu0
  %v331 = vadd.f32 %v259, %v330
  %332 = vdwg.mxu0
  %333 = vmatpush.msra.mxu0 0.0
  %334 = vmatpush.msra.mxu0 0.0
  %335 = vmatpush.msra.mxu0 0.0
  %336 = vmatpush.msra.mxu0 0.0
  %337 = vmatpush.msra.mxu0 0.0
  %338 = vmatpush.msra.mxu0 0.0
  %339 = vmatpush.msra.mxu0 0.0
  %340 = vmatpush.msra.mxu0 0.0
  %341 = vmatpush.msra.mxu0 0.0
  %342 = vmatpush.msra.mxu0 0.0
  %343 = vmatpush.msra.mxu0 0.0
  %344 = vmatpush.msra.mxu0 0.0
  %345 = vmatpush.msra.mxu0 0.0
  %346 = vmatpush.msra.mxu0 0.0
  %347 = vmatpush.msra.mxu0 0.0
  %v348 = vand.u32 %v20, 4294901760
  %v349 = vsub.f32 %v20, %v348
  %v350 = vand.u32 %v349, 4294901760
  %351 = vmatpush.msra.mxu0 %v350
  %v352 = vand.u32 %v23, 4294901760
  %353 = vmatmul.f32.gmra.mxu0 %v352
  %v354 = vpop.f32.mrf.mxu0
  %v355 = vadd.f32 %v283, %v354
  %v356 = vand.u32 %v26, 4294901760
  %357 = vmatmul.f32.gmra.mxu0 %v356
  %v358 = vpop.f32.mrf.mxu0
  %v359 = vadd.f32 %v289, %v358
  %v360 = vand.u32 %v29, 4294901760
  %361 = vmatmul.f32.gmra.mxu0 %v360
  %v362 = vpop.f32.mrf.mxu0
  %v363 = vadd.f32 %v295, %v362
  %v364 = vand.u32 %v32, 4294901760
  %365 = vmatmul.f32.gmra.mxu0 %v364
  %v366 = vpop.f32.mrf.mxu0
  %v367 = vadd.f32 %v301, %v366
  %v368 = vand.u32 %v35, 4294901760
  %369 = vmatmul.f32.gmra.mxu0 %v368
  %v370 = vpop.f32.mrf.mxu0
  %v371 = vadd.f32 %v307, %v370
  %v372 = vand.u32 %v38, 4294901760
  %373 = vmatmul.f32.gmra.mxu0 %v372
  %v374 = vpop.f32.mrf.mxu0
  %v375 = vadd.f32 %v313, %v374
  %v376 = vand.u32 %v41, 4294901760
  %377 = vmatmul.f32.gmra.mxu0 %v376
  %v378 = vpop.f32.mrf.mxu0
  %v379 = vadd.f32 %v319, %v378
  %v380 = vand.u32 %v44, 4294901760
  %381 = vmatmul.f32.gmra.mxu0 %v380
  %v382 = vpop.f32.mrf.mxu0
  %v383 = vadd.f32 %v325, %v382
  %v384 = vand.u32 %v47, 4294901760
  %385 = vmatmul.f32.gmra.mxu0 %v384
  %v386 = vpop.f32.mrf.mxu0
  %v387 = vadd.f32 %v331, %v386
  %388 = vdwg.mxu0
  %389 = vmatpush.msra.mxu0 0.0
  %390 = vmatpush.msra.mxu0 0.0
  %391 = vmatpush.msra.mxu0 0.0
  %392 = vmatpush.msra.mxu0 0.0
  %393 = vmatpush.msra.mxu0 0.0
  %394 = vmatpush.msra.mxu0 0.0
  %395 = vmatpush.msra.mxu0 0.0
  %396 = vmatpush.msra.mxu0 0.0
  %397 = vmatpush.msra.mxu0 0.0
  %398 = vmatpush.msra.mxu0 0.0
  %399 = vmatpush.msra.mxu0 0.0
  %400 = vmatpush.msra.mxu0 0.0
  %401 = vmatpush.msra.mxu0 0.0
  %402 = vmatpush.msra.mxu0 0.0
  %403 = vmatpush.msra.mxu0 0.0
  %v404 = vand.u32 %v20, 4294901760
  %405 = vmatpush.msra.mxu0 %v404
  %v406 = vand.u32 %v23, 4294901760
  %407 = vmatmul.f32.gmra.mxu0 %v406
  %v408 = vpop.f32.mrf.mxu0
  %v409 = vadd.f32 %v355, %v408
  %v410 = vand.u32 %v26, 4294901760
  %411 = vmatmul.f32.gmra.mxu0 %v410
  %v412 = vpop.f32.mrf.mxu0
  %v413 = vadd.f32 %v359, %v412
  %v414 = vand.u32 %v29, 4294901760
  %415 = vmatmul.f32.gmra.mxu0 %v414
  %v416 = vpop.f32.mrf.mxu0
  %v417 = vadd.f32 %v363, %v416
  %v418 = vand.u32 %v32, 4294901760
  %419 = vmatmul.f32.gmra.mxu0 %v418
  %v420 = vpop.f32.mrf.mxu0
  %v421 = vadd.f32 %v367, %v420
  %v422 = vand.u32 %v35, 4294901760
  %423 = vmatmul.f32.gmra.mxu0 %v422
  %v424 = vpop.f32.mrf.mxu0
  %v425 = vadd.f32 %v371, %v424
  %v426 = vand.u32 %v38, 4294901760
  %427 = vmatmul.f32.gmra.mxu0 %v426
  %v428 = vpop.f32.mrf.mxu0
  %v429 = vadd.f32 %v375, %v428
  %v430 = vand.u32 %v41, 4294901760
  %431 = vmatmul.f32.gmra.mxu0 %v430
  %v432 = vpop.f32.mrf.mxu0
  %v433 = vadd.f32 %v379, %v432
  %v434 = vand.u32 %v44, 4294901760
  %435 = vmatmul.f32.gmra.mxu0 %v434
  %v436 = vpop.f32.mrf.mxu0
  %v437 = vadd.f32 %v383, %v436
  %v438 = vand.u32 %v47, 4294901760
  %439 = vmatmul.f32.gmra.mxu0 %v438
  %v440 = vpop.f32.mrf.mxu0
  %v441 = vadd.f32 %v387, %v440
  %442 = vdwg.mxu0
  %s443 = scalar_lea.vmem %s1, 8
  %v444 = vld [vmem:[%s443] sm:$0xff]
  %445 = vmatpush.msra.mxu0 0.0
  %446 = vmatpush.msra.mxu0 0.0
  %447 = vmatpush.msra.mxu0 0.0
  %448 = vmatpush.msra.mxu0 0.0
  %449 = vmatpush.msra.mxu0 0.0
  %450 = vmatpush.msra.mxu0 0.0
  %451 = vmatpush.msra.mxu0 0.0
  %452 = vmatpush.msra.mxu0 0.0
  %453 = vmatpush.msra.mxu0 0.0
  %454 = vmatpush.msra.mxu0 0.0
  %455 = vmatpush.msra.mxu0 0.0
  %456 = vmatpush.msra.mxu0 0.0
  %457 = vmatpush.msra.mxu0 0.0
  %458 = vmatpush.msra.mxu0 0.0
  %459 = vmatpush.msra.mxu0 0.0
  %v460 = vand.u32 %v444, 4294901760
  %461 = vmatpush.msra.mxu0 %v460
  %v462 = vand.u32 %v23, 4294901760
  %v463 = vsub.f32 %v23, %v462
  %v464 = vand.u32 %v463, 4294901760
  %v465 = vsub.f32 %v463, %v464
  %v466 = vand.u32 %v465, 4294901760
  %467 = vmatmul.f32.gmra.mxu0 %v466
  %v468 = vpop.f32.mrf.mxu0
  %v469 = vadd.f32 0.0, %v468
  %v470 = vand.u32 %v26, 4294901760
  %v471 = vsub.f32 %v26, %v470
  %v472 = vand.u32 %v471, 4294901760
  %v473 = vsub.f32 %v471, %v472
  %v474 = vand.u32 %v473, 4294901760
  %475 = vmatmul.f32.gmra.mxu0 %v474
  %v476 = vpop.f32.mrf.mxu0
  %v477 = vadd.f32 0.0, %v476
  %v478 = vand.u32 %v29, 4294901760
  %v479 = vsub.f32 %v29, %v478
  %v480 = vand.u32 %v479, 4294901760
  %v481 = vsub.f32 %v479, %v480
  %v482 = vand.u32 %v481, 4294901760
  %483 = vmatmul.f32.gmra.mxu0 %v482
  %v484 = vpop.f32.mrf.mxu0
  %v485 = vadd.f32 0.0, %v484
  %v486 = vand.u32 %v32, 4294901760
  %v487 = vsub.f32 %v32, %v486
  %v488 = vand.u32 %v487, 4294901760
  %v489 = vsub.f32 %v487, %v488
  %v490 = vand.u32 %v489, 4294901760
  %491 = vmatmul.f32.gmra.mxu0 %v490
  %v492 = vpop.f32.mrf.mxu0
  %v493 = vadd.f32 0.0, %v492
  %v494 = vand.u32 %v35, 4294901760
  %v495 = vsub.f32 %v35, %v494
  %v496 = vand.u32 %v495, 4294901760
  %v497 = vsub.f32 %v495, %v496
  %v498 = vand.u32 %v497, 4294901760
  %499 = vmatmul.f32.gmra.mxu0 %v498
  %v500 = vpop.f32.mrf.mxu0
  %v501 = vadd.f32 0.0, %v500
  %v502 = vand.u32 %v38, 4294901760
  %v503 = vsub.f32 %v38, %v502
  %v504 = vand.u32 %v503, 4294901760
  %v505 = vsub.f32 %v503, %v504
  %v506 = vand.u32 %v505, 4294901760
  %507 = vmatmul.f32.gmra.mxu0 %v506
  %v508 = vpop.f32.mrf.mxu0
  %v509 = vadd.f32 0.0, %v508
  %v510 = vand.u32 %v41, 4294901760
  %v511 = vsub.f32 %v41, %v510
  %v512 = vand.u32 %v511, 4294901760
  %v513 = vsub.f32 %v511, %v512
  %v514 = vand.u32 %v513, 4294901760
  %515 = vmatmul.f32.gmra.mxu0 %v514
  %v516 = vpop.f32.mrf.mxu0
  %v517 = vadd.f32 0.0, %v516
  %v518 = vand.u32 %v44, 4294901760
  %v519 = vsub.f32 %v44, %v518
  %v520 = vand.u32 %v519, 4294901760
  %v521 = vsub.f32 %v519, %v520
  %v522 = vand.u32 %v521, 4294901760
  %523 = vmatmul.f32.gmra.mxu0 %v522
  %v524 = vpop.f32.mrf.mxu0
  %v525 = vadd.f32 0.0, %v524
  %v526 = vand.u32 %v47, 4294901760
  %v527 = vsub.f32 %v47, %v526
  %v528 = vand.u32 %v527, 4294901760
  %v529 = vsub.f32 %v527, %v528
  %v530 = vand.u32 %v529, 4294901760
  %531 = vmatmul.f32.gmra.mxu0 %v530
  %v532 = vpop.f32.mrf.mxu0
  %v533 = vadd.f32 0.0, %v532
  %534 = vdwg.mxu0
  %535 = vmatpush.msra.mxu0 0.0
  %536 = vmatpush.msra.mxu0 0.0
  %537 = vmatpush.msra.mxu0 0.0
  %538 = vmatpush.msra.mxu0 0.0
  %539 = vmatpush.msra.mxu0 0.0
  %540 = vmatpush.msra.mxu0 0.0
  %541 = vmatpush.msra.mxu0 0.0
  %542 = vmatpush.msra.mxu0 0.0
  %543 = vmatpush.msra.mxu0 0.0
  %544 = vmatpush.msra.mxu0 0.0
  %545 = vmatpush.msra.mxu0 0.0
  %546 = vmatpush.msra.mxu0 0.0
  %547 = vmatpush.msra.mxu0 0.0
  %548 = vmatpush.msra.mxu0 0.0
  %549 = vmatpush.msra.mxu0 0.0
  %v550 = vand.u32 %v444, 4294901760
  %v551 = vsub.f32 %v444, %v550
  %v552 = vand.u32 %v551, 4294901760
  %v553 = vsub.f32 %v551, %v552
  %v554 = vand.u32 %v553, 4294901760
  %555 = vmatpush.msra.mxu0 %v554
  %v556 = vand.u32 %v23, 4294901760
  %557 = vmatmul.f32.gmra.mxu0 %v556
  %v558 = vpop.f32.mrf.mxu0
  %v559 = vadd.f32 %v469, %v558
  %v560 = vand.u32 %v26, 4294901760
  %561 = vmatmul.f32.gmra.mxu0 %v560
  %v562 = vpop.f32.mrf.mxu0
  %v563 = vadd.f32 %v477, %v562
  %v564 = vand.u32 %v29, 4294901760
  %565 = vmatmul.f32.gmra.mxu0 %v564
  %v566 = vpop.f32.mrf.mxu0
  %v567 = vadd.f32 %v485, %v566
  %v568 = vand.u32 %v32, 4294901760
  %569 = vmatmul.f32.gmra.mxu0 %v568
  %v570 = vpop.f32.mrf.mxu0
  %v571 = vadd.f32 %v493, %v570
  %v572 = vand.u32 %v35, 4294901760
  %573 = vmatmul.f32.gmra.mxu0 %v572
  %v574 = vpop.f32.mrf.mxu0
  %v575 = vadd.f32 %v501, %v574
  %v576 = vand.u32 %v38, 4294901760
  %577 = vmatmul.f32.gmra.mxu0 %v576
  %v578 = vpop.f32.mrf.mxu0
  %v579 = vadd.f32 %v509, %v578
  %v580 = vand.u32 %v41, 4294901760
  %581 = vmatmul.f32.gmra.mxu0 %v580
  %v582 = vpop.f32.mrf.mxu0
  %v583 = vadd.f32 %v517, %v582
  %v584 = vand.u32 %v44, 4294901760
  %585 = vmatmul.f32.gmra.mxu0 %v584
  %v586 = vpop.f32.mrf.mxu0
  %v587 = vadd.f32 %v525, %v586
  %v588 = vand.u32 %v47, 4294901760
  %589 = vmatmul.f32.gmra.mxu0 %v588
  %v590 = vpop.f32.mrf.mxu0
  %v591 = vadd.f32 %v533, %v590
  %592 = vdwg.mxu0
  %593 = vmatpush.msra.mxu0 0.0
  %594 = vmatpush.msra.mxu0 0.0
  %595 = vmatpush.msra.mxu0 0.0
  %596 = vmatpush.msra.mxu0 0.0
  %597 = vmatpush.msra.mxu0 0.0
  %598 = vmatpush.msra.mxu0 0.0
  %599 = vmatpush.msra.mxu0 0.0
  %600 = vmatpush.msra.mxu0 0.0
  %601 = vmatpush.msra.mxu0 0.0
  %602 = vmatpush.msra.mxu0 0.0
  %603 = vmatpush.msra.mxu0 0.0
  %604 = vmatpush.msra.mxu0 0.0
  %605 = vmatpush.msra.mxu0 0.0
  %606 = vmatpush.msra.mxu0 0.0
  %607 = vmatpush.msra.mxu0 0.0
  %v608 = vand.u32 %v444, 4294901760
  %v609 = vsub.f32 %v444, %v608
  %610 = vmatpush.msra.mxu0 %v609
  %v611 = vand.u32 %v23, 4294901760
  %v612 = vsub.f32 %v23, %v611
  %613 = vmatmul.f32.gmra.mxu0 %v612
  %v614 = vpop.f32.mrf.mxu0
  %v615 = vadd.f32 %v559, %v614
  %v616 = vand.u32 %v26, 4294901760
  %v617 = vsub.f32 %v26, %v616
  %618 = vmatmul.f32.gmra.mxu0 %v617
  %v619 = vpop.f32.mrf.mxu0
  %v620 = vadd.f32 %v563, %v619
  %v621 = vand.u32 %v29, 4294901760
  %v622 = vsub.f32 %v29, %v621
  %623 = vmatmul.f32.gmra.mxu0 %v622
  %v624 = vpop.f32.mrf.mxu0
  %v625 = vadd.f32 %v567, %v624
  %v626 = vand.u32 %v32, 4294901760
  %v627 = vsub.f32 %v32, %v626
  %628 = vmatmul.f32.gmra.mxu0 %v627
  %v629 = vpop.f32.mrf.mxu0
  %v630 = vadd.f32 %v571, %v629
  %v631 = vand.u32 %v35, 4294901760
  %v632 = vsub.f32 %v35, %v631
  %633 = vmatmul.f32.gmra.mxu0 %v632
  %v634 = vpop.f32.mrf.mxu0
  %v635 = vadd.f32 %v575, %v634
  %v636 = vand.u32 %v38, 4294901760
  %v637 = vsub.f32 %v38, %v636
  %638 = vmatmul.f32.gmra.mxu0 %v637
  %v639 = vpop.f32.mrf.mxu0
  %v640 = vadd.f32 %v579, %v639
  %v641 = vand.u32 %v41, 4294901760
  %v642 = vsub.f32 %v41, %v641
  %643 = vmatmul.f32.gmra.mxu0 %v642
  %v644 = vpop.f32.mrf.mxu0
  %v645 = vadd.f32 %v583, %v644
  %v646 = vand.u32 %v44, 4294901760
  %v647 = vsub.f32 %v44, %v646
  %648 = vmatmul.f32.gmra.mxu0 %v647
  %v649 = vpop.f32.mrf.mxu0
  %v650 = vadd.f32 %v587, %v649
  %v651 = vand.u32 %v47, 4294901760
  %v652 = vsub.f32 %v47, %v651
  %653 = vmatmul.f32.gmra.mxu0 %v652
  %v654 = vpop.f32.mrf.mxu0
  %v655 = vadd.f32 %v591, %v654
  %656 = vdwg.mxu0
  %657 = vmatpush.msra.mxu0 0.0
  %658 = vmatpush.msra.mxu0 0.0
  %659 = vmatpush.msra.mxu0 0.0
  %660 = vmatpush.msra.mxu0 0.0
  %661 = vmatpush.msra.mxu0 0.0
  %662 = vmatpush.msra.mxu0 0.0
  %663 = vmatpush.msra.mxu0 0.0
  %664 = vmatpush.msra.mxu0 0.0
  %665 = vmatpush.msra.mxu0 0.0
  %666 = vmatpush.msra.mxu0 0.0
  %667 = vmatpush.msra.mxu0 0.0
  %668 = vmatpush.msra.mxu0 0.0
  %669 = vmatpush.msra.mxu0 0.0
  %670 = vmatpush.msra.mxu0 0.0
  %671 = vmatpush.msra.mxu0 0.0
  %v672 = vand.u32 %v444, 4294901760
  %673 = vmatpush.msra.mxu0 %v672
  %v674 = vand.u32 %v23, 4294901760
  %v675 = vsub.f32 %v23, %v674
  %v676 = vand.u32 %v675, 4294901760
  %677 = vmatmul.f32.gmra.mxu0 %v676
  %v678 = vpop.f32.mrf.mxu0
  %v679 = vadd.f32 %v615, %v678
  %v680 = vand.u32 %v26, 4294901760
  %v681 = vsub.f32 %v26, %v680
  %v682 = vand.u32 %v681, 4294901760
  %683 = vmatmul.f32.gmra.mxu0 %v682
  %v684 = vpop.f32.mrf.mxu0
  %v685 = vadd.f32 %v620, %v684
  %v686 = vand.u32 %v29, 4294901760
  %v687 = vsub.f32 %v29, %v686
  %v688 = vand.u32 %v687, 4294901760
  %689 = vmatmul.f32.gmra.mxu0 %v688
  %v690 = vpop.f32.mrf.mxu0
  %v691 = vadd.f32 %v625, %v690
  %v692 = vand.u32 %v32, 4294901760
  %v693 = vsub.f32 %v32, %v692
  %v694 = vand.u32 %v693, 4294901760
  %695 = vmatmul.f32.gmra.mxu0 %v694
  %v696 = vpop.f32.mrf.mxu0
  %v697 = vadd.f32 %v630, %v696
  %v698 = vand.u32 %v35, 4294901760
  %v699 = vsub.f32 %v35, %v698
  %v700 = vand.u32 %v699, 4294901760
  %701 = vmatmul.f32.gmra.mxu0 %v700
  %v702 = vpop.f32.mrf.mxu0
  %v703 = vadd.f32 %v635, %v702
  %v704 = vand.u32 %v38, 4294901760
  %v705 = vsub.f32 %v38, %v704
  %v706 = vand.u32 %v705, 4294901760
  %707 = vmatmul.f32.gmra.mxu0 %v706
  %v708 = vpop.f32.mrf.mxu0
  %v709 = vadd.f32 %v640, %v708
  %v710 = vand.u32 %v41, 4294901760
  %v711 = vsub.f32 %v41, %v710
  %v712 = vand.u32 %v711, 4294901760
  %713 = vmatmul.f32.gmra.mxu0 %v712
  %v714 = vpop.f32.mrf.mxu0
  %v715 = vadd.f32 %v645, %v714
  %v716 = vand.u32 %v44, 4294901760
  %v717 = vsub.f32 %v44, %v716
  %v718 = vand.u32 %v717, 4294901760
  %719 = vmatmul.f32.gmra.mxu0 %v718
  %v720 = vpop.f32.mrf.mxu0
  %v721 = vadd.f32 %v650, %v720
  %v722 = vand.u32 %v47, 4294901760
  %v723 = vsub.f32 %v47, %v722
  %v724 = vand.u32 %v723, 4294901760
  %725 = vmatmul.f32.gmra.mxu0 %v724
  %v726 = vpop.f32.mrf.mxu0
  %v727 = vadd.f32 %v655, %v726
  %728 = vdwg.mxu0
  %729 = vmatpush.msra.mxu0 0.0
  %730 = vmatpush.msra.mxu0 0.0
  %731 = vmatpush.msra.mxu0 0.0
  %732 = vmatpush.msra.mxu0 0.0
  %733 = vmatpush.msra.mxu0 0.0
  %734 = vmatpush.msra.mxu0 0.0
  %735 = vmatpush.msra.mxu0 0.0
  %736 = vmatpush.msra.mxu0 0.0
  %737 = vmatpush.msra.mxu0 0.0
  %738 = vmatpush.msra.mxu0 0.0
  %739 = vmatpush.msra.mxu0 0.0
  %740 = vmatpush.msra.mxu0 0.0
  %741 = vmatpush.msra.mxu0 0.0
  %742 = vmatpush.msra.mxu0 0.0
  %743 = vmatpush.msra.mxu0 0.0
  %v744 = vand.u32 %v444, 4294901760
  %v745 = vsub.f32 %v444, %v744
  %v746 = vand.u32 %v745, 4294901760
  %747 = vmatpush.msra.mxu0 %v746
  %v748 = vand.u32 %v23, 4294901760
  %749 = vmatmul.f32.gmra.mxu0 %v748
  %v750 = vpop.f32.mrf.mxu0
  %v751 = vadd.f32 %v679, %v750
  %v752 = vand.u32 %v26, 4294901760
  %753 = vmatmul.f32.gmra.mxu0 %v752
  %v754 = vpop.f32.mrf.mxu0
  %v755 = vadd.f32 %v685, %v754
  %v756 = vand.u32 %v29, 4294901760
  %757 = vmatmul.f32.gmra.mxu0 %v756
  %v758 = vpop.f32.mrf.mxu0
  %v759 = vadd.f32 %v691, %v758
  %v760 = vand.u32 %v32, 4294901760
  %761 = vmatmul.f32.gmra.mxu0 %v760
  %v762 = vpop.f32.mrf.mxu0
  %v763 = vadd.f32 %v697, %v762
  %v764 = vand.u32 %v35, 4294901760
  %765 = vmatmul.f32.gmra.mxu0 %v764
  %v766 = vpop.f32.mrf.mxu0
  %v767 = vadd.f32 %v703, %v766
  %v768 = vand.u32 %v38, 4294901760
  %769 = vmatmul.f32.gmra.mxu0 %v768
  %v770 = vpop.f32.mrf.mxu0
  %v771 = vadd.f32 %v709, %v770
  %v772 = vand.u32 %v41, 4294901760
  %773 = vmatmul.f32.gmra.mxu0 %v772
  %v774 = vpop.f32.mrf.mxu0
  %v775 = vadd.f32 %v715, %v774
  %v776 = vand.u32 %v44, 4294901760
  %777 = vmatmul.f32.gmra.mxu0 %v776
  %v778 = vpop.f32.mrf.mxu0
  %v779 = vadd.f32 %v721, %v778
  %v780 = vand.u32 %v47, 4294901760
  %781 = vmatmul.f32.gmra.mxu0 %v780
  %v782 = vpop.f32.mrf.mxu0
  %v783 = vadd.f32 %v727, %v782
  %784 = vdwg.mxu0
  %785 = vmatpush.msra.mxu0 0.0
  %786 = vmatpush.msra.mxu0 0.0
  %787 = vmatpush.msra.mxu0 0.0
  %788 = vmatpush.msra.mxu0 0.0
  %789 = vmatpush.msra.mxu0 0.0
  %790 = vmatpush.msra.mxu0 0.0
  %791 = vmatpush.msra.mxu0 0.0
  %792 = vmatpush.msra.mxu0 0.0
  %793 = vmatpush.msra.mxu0 0.0
  %794 = vmatpush.msra.mxu0 0.0
  %795 = vmatpush.msra.mxu0 0.0
  %796 = vmatpush.msra.mxu0 0.0
  %797 = vmatpush.msra.mxu0 0.0
  %798 = vmatpush.msra.mxu0 0.0
  %799 = vmatpush.msra.mxu0 0.0
  %v800 = vand.u32 %v444, 4294901760
  %801 = vmatpush.msra.mxu0 %v800
  %v802 = vand.u32 %v23, 4294901760
  %803 = vmatmul.f32.gmra.mxu0 %v802
  %v804 = vpop.f32.mrf.mxu0
  %v805 = vadd.f32 %v751, %v804
  %v806 = vand.u32 %v26, 4294901760
  %807 = vmatmul.f32.gmra.mxu0 %v806
  %v808 = vpop.f32.mrf.mxu0
  %v809 = vadd.f32 %v755, %v808
  %v810 = vand.u32 %v29, 4294901760
  %811 = vmatmul.f32.gmra.mxu0 %v810
  %v812 = vpop.f32.mrf.mxu0
  %v813 = vadd.f32 %v759, %v812
  %v814 = vand.u32 %v32, 4294901760
  %815 = vmatmul.f32.gmra.mxu0 %v814
  %v816 = vpop.f32.mrf.mxu0
  %v817 = vadd.f32 %v763, %v816
  %v818 = vand.u32 %v35, 4294901760
  %819 = vmatmul.f32.gmra.mxu0 %v818
  %v820 = vpop.f32.mrf.mxu0
  %v821 = vadd.f32 %v767, %v820
  %v822 = vand.u32 %v38, 4294901760
  %823 = vmatmul.f32.gmra.mxu0 %v822
  %v824 = vpop.f32.mrf.mxu0
  %v825 = vadd.f32 %v771, %v824
  %v826 = vand.u32 %v41, 4294901760
  %827 = vmatmul.f32.gmra.mxu0 %v826
  %v828 = vpop.f32.mrf.mxu0
  %v829 = vadd.f32 %v775, %v828
  %v830 = vand.u32 %v44, 4294901760
  %831 = vmatmul.f32.gmra.mxu0 %v830
  %v832 = vpop.f32.mrf.mxu0
  %v833 = vadd.f32 %v779, %v832
  %v834 = vand.u32 %v47, 4294901760
  %835 = vmatmul.f32.gmra.mxu0 %v834
  %v836 = vpop.f32.mrf.mxu0
  %v837 = vadd.f32 %v783, %v836
  %838 = vdwg.mxu0
  %s839 = scalar_lea.vmem %s1, 16
  %v840 = vld [vmem:[%s839] sm:$0xff]
  %841 = vmatpush.msra.mxu0 0.0
  %842 = vmatpush.msra.mxu0 0.0
  %843 = vmatpush.msra.mxu0 0.0
  %844 = vmatpush.msra.mxu0 0.0
  %845 = vmatpush.msra.mxu0 0.0
  %846 = vmatpush.msra.mxu0 0.0
  %847 = vmatpush.msra.mxu0 0.0
  %848 = vmatpush.msra.mxu0 0.0
  %849 = vmatpush.msra.mxu0 0.0
  %850 = vmatpush.msra.mxu0 0.0
  %851 = vmatpush.msra.mxu0 0.0
  %852 = vmatpush.msra.mxu0 0.0
  %853 = vmatpush.msra.mxu0 0.0
  %854 = vmatpush.msra.mxu0 0.0
  %855 = vmatpush.msra.mxu0 0.0
  %v856 = vand.u32 %v840, 4294901760
  %857 = vmatpush.msra.mxu0 %v856
  %v858 = vand.u32 %v23, 4294901760
  %v859 = vsub.f32 %v23, %v858
  %v860 = vand.u32 %v859, 4294901760
  %v861 = vsub.f32 %v859, %v860
  %v862 = vand.u32 %v861, 4294901760
  %863 = vmatmul.f32.gmra.mxu0 %v862
  %v864 = vpop.f32.mrf.mxu0
  %v865 = vadd.f32 0.0, %v864
  %v866 = vand.u32 %v26, 4294901760
  %v867 = vsub.f32 %v26, %v866
  %v868 = vand.u32 %v867, 4294901760
  %v869 = vsub.f32 %v867, %v868
  %v870 = vand.u32 %v869, 4294901760
  %871 = vmatmul.f32.gmra.mxu0 %v870
  %v872 = vpop.f32.mrf.mxu0
  %v873 = vadd.f32 0.0, %v872
  %v874 = vand.u32 %v29, 4294901760
  %v875 = vsub.f32 %v29, %v874
  %v876 = vand.u32 %v875, 4294901760
  %v877 = vsub.f32 %v875, %v876
  %v878 = vand.u32 %v877, 4294901760
  %879 = vmatmul.f32.gmra.mxu0 %v878
  %v880 = vpop.f32.mrf.mxu0
  %v881 = vadd.f32 0.0, %v880
  %v882 = vand.u32 %v32, 4294901760
  %v883 = vsub.f32 %v32, %v882
  %v884 = vand.u32 %v883, 4294901760
  %v885 = vsub.f32 %v883, %v884
  %v886 = vand.u32 %v885, 4294901760
  %887 = vmatmul.f32.gmra.mxu0 %v886
  %v888 = vpop.f32.mrf.mxu0
  %v889 = vadd.f32 0.0, %v888
  %v890 = vand.u32 %v35, 4294901760
  %v891 = vsub.f32 %v35, %v890
  %v892 = vand.u32 %v891, 4294901760
  %v893 = vsub.f32 %v891, %v892
  %v894 = vand.u32 %v893, 4294901760
  %895 = vmatmul.f32.gmra.mxu0 %v894
  %v896 = vpop.f32.mrf.mxu0
  %v897 = vadd.f32 0.0, %v896
  %v898 = vand.u32 %v38, 4294901760
  %v899 = vsub.f32 %v38, %v898
  %v900 = vand.u32 %v899, 4294901760
  %v901 = vsub.f32 %v899, %v900
  %v902 = vand.u32 %v901, 4294901760
  %903 = vmatmul.f32.gmra.mxu0 %v902
  %v904 = vpop.f32.mrf.mxu0
  %v905 = vadd.f32 0.0, %v904
  %v906 = vand.u32 %v41, 4294901760
  %v907 = vsub.f32 %v41, %v906
  %v908 = vand.u32 %v907, 4294901760
  %v909 = vsub.f32 %v907, %v908
  %v910 = vand.u32 %v909, 4294901760
  %911 = vmatmul.f32.gmra.mxu0 %v910
  %v912 = vpop.f32.mrf.mxu0
  %v913 = vadd.f32 0.0, %v912
  %v914 = vand.u32 %v44, 4294901760
  %v915 = vsub.f32 %v44, %v914
  %v916 = vand.u32 %v915, 4294901760
  %v917 = vsub.f32 %v915, %v916
  %v918 = vand.u32 %v917, 4294901760
  %919 = vmatmul.f32.gmra.mxu0 %v918
  %v920 = vpop.f32.mrf.mxu0
  %v921 = vadd.f32 0.0, %v920
  %v922 = vand.u32 %v47, 4294901760
  %v923 = vsub.f32 %v47, %v922
  %v924 = vand.u32 %v923, 4294901760
  %v925 = vsub.f32 %v923, %v924
  %v926 = vand.u32 %v925, 4294901760
  %927 = vmatmul.f32.gmra.mxu0 %v926
  %v928 = vpop.f32.mrf.mxu0
  %v929 = vadd.f32 0.0, %v928
  %930 = vdwg.mxu0
  %931 = vmatpush.msra.mxu0 0.0
  %932 = vmatpush.msra.mxu0 0.0
  %933 = vmatpush.msra.mxu0 0.0
  %934 = vmatpush.msra.mxu0 0.0
  %935 = vmatpush.msra.mxu0 0.0
  %936 = vmatpush.msra.mxu0 0.0
  %937 = vmatpush.msra.mxu0 0.0
  %938 = vmatpush.msra.mxu0 0.0
  %939 = vmatpush.msra.mxu0 0.0
  %940 = vmatpush.msra.mxu0 0.0
  %941 = vmatpush.msra.mxu0 0.0
  %942 = vmatpush.msra.mxu0 0.0
  %943 = vmatpush.msra.mxu0 0.0
  %944 = vmatpush.msra.mxu0 0.0
  %945 = vmatpush.msra.mxu0 0.0
  %v946 = vand.u32 %v840, 4294901760
  %v947 = vsub.f32 %v840, %v946
  %v948 = vand.u32 %v947, 4294901760
  %v949 = vsub.f32 %v947, %v948
  %v950 = vand.u32 %v949, 4294901760
  %951 = vmatpush.msra.mxu0 %v950
  %v952 = vand.u32 %v23, 4294901760
  %953 = vmatmul.f32.gmra.mxu0 %v952
  %v954 = vpop.f32.mrf.mxu0
  %v955 = vadd.f32 %v865, %v954
  %v956 = vand.u32 %v26, 4294901760
  %957 = vmatmul.f32.gmra.mxu0 %v956
  %v958 = vpop.f32.mrf.mxu0
  %v959 = vadd.f32 %v873, %v958
  %v960 = vand.u32 %v29, 4294901760
  %961 = vmatmul.f32.gmra.mxu0 %v960
  %v962 = vpop.f32.mrf.mxu0
  %v963 = vadd.f32 %v881, %v962
  %v964 = vand.u32 %v32, 4294901760
  %965 = vmatmul.f32.gmra.mxu0 %v964
  %v966 = vpop.f32.mrf.mxu0
  %v967 = vadd.f32 %v889, %v966
  %v968 = vand.u32 %v35, 4294901760
  %969 = vmatmul.f32.gmra.mxu0 %v968
  %v970 = vpop.f32.mrf.mxu0
  %v971 = vadd.f32 %v897, %v970
  %v972 = vand.u32 %v38, 4294901760
  %973 = vmatmul.f32.gmra.mxu0 %v972
  %v974 = vpop.f32.mrf.mxu0
  %v975 = vadd.f32 %v905, %v974
  %v976 = vand.u32 %v41, 4294901760
  %977 = vmatmul.f32.gmra.mxu0 %v976
  %v978 = vpop.f32.mrf.mxu0
  %v979 = vadd.f32 %v913, %v978
  %v980 = vand.u32 %v44, 4294901760
  %981 = vmatmul.f32.gmra.mxu0 %v980
  %v982 = vpop.f32.mrf.mxu0
  %v983 = vadd.f32 %v921, %v982
  %v984 = vand.u32 %v47, 4294901760
  %985 = vmatmul.f32.gmra.mxu0 %v984
  %v986 = vpop.f32.mrf.mxu0
  %v987 = vadd.f32 %v929, %v986
  %988 = vdwg.mxu0
  %989 = vmatpush.msra.mxu0 0.0
  %990 = vmatpush.msra.mxu0 0.0
  %991 = vmatpush.msra.mxu0 0.0
  %992 = vmatpush.msra.mxu0 0.0
  %993 = vmatpush.msra.mxu0 0.0
  %994 = vmatpush.msra.mxu0 0.0
  %995 = vmatpush.msra.mxu0 0.0
  %996 = vmatpush.msra.mxu0 0.0
  %997 = vmatpush.msra.mxu0 0.0
  %998 = vmatpush.msra.mxu0 0.0
  %999 = vmatpush.msra.mxu0 0.0
  %1000 = vmatpush.msra.mxu0 0.0
  %1001 = vmatpush.msra.mxu0 0.0
  %1002 = vmatpush.msra.mxu0 0.0
  %1003 = vmatpush.msra.mxu0 0.0
  %v1004 = vand.u32 %v840, 4294901760
  %v1005 = vsub.f32 %v840, %v1004
  %1006 = vmatpush.msra.mxu0 %v1005
  %v1007 = vand.u32 %v23, 4294901760
  %v1008 = vsub.f32 %v23, %v1007
  %1009 = vmatmul.f32.gmra.mxu0 %v1008
  %v1010 = vpop.f32.mrf.mxu0
  %v1011 = vadd.f32 %v955, %v1010
  %v1012 = vand.u32 %v26, 4294901760
  %v1013 = vsub.f32 %v26, %v1012
  %1014 = vmatmul.f32.gmra.mxu0 %v1013
  %v1015 = vpop.f32.mrf.mxu0
  %v1016 = vadd.f32 %v959, %v1015
  %v1017 = vand.u32 %v29, 4294901760
  %v1018 = vsub.f32 %v29, %v1017
  %1019 = vmatmul.f32.gmra.mxu0 %v1018
  %v1020 = vpop.f32.mrf.mxu0
  %v1021 = vadd.f32 %v963, %v1020
  %v1022 = vand.u32 %v32, 4294901760
  %v1023 = vsub.f32 %v32, %v1022
  %1024 = vmatmul.f32.gmra.mxu0 %v1023
  %v1025 = vpop.f32.mrf.mxu0
  %v1026 = vadd.f32 %v967, %v1025
  %v1027 = vand.u32 %v35, 4294901760
  %v1028 = vsub.f32 %v35, %v1027
  %1029 = vmatmul.f32.gmra.mxu0 %v1028
  %v1030 = vpop.f32.mrf.mxu0
  %v1031 = vadd.f32 %v971, %v1030
  %v1032 = vand.u32 %v38, 4294901760
  %v1033 = vsub.f32 %v38, %v1032
  %1034 = vmatmul.f32.gmra.mxu0 %v1033
  %v1035 = vpop.f32.mrf.mxu0
  %v1036 = vadd.f32 %v975, %v1035
  %v1037 = vand.u32 %v41, 4294901760
  %v1038 = vsub.f32 %v41, %v1037
  %1039 = vmatmul.f32.gmra.mxu0 %v1038
  %v1040 = vpop.f32.mrf.mxu0
  %v1041 = vadd.f32 %v979, %v1040
  %v1042 = vand.u32 %v44, 4294901760
  %v1043 = vsub.f32 %v44, %v1042
  %1044 = vmatmul.f32.gmra.mxu0 %v1043
  %v1045 = vpop.f32.mrf.mxu0
  %v1046 = vadd.f32 %v983, %v1045
  %v1047 = vand.u32 %v47, 4294901760
  %v1048 = vsub.f32 %v47, %v1047
  %1049 = vmatmul.f32.gmra.mxu0 %v1048
  %v1050 = vpop.f32.mrf.mxu0
  %v1051 = vadd.f32 %v987, %v1050
  %1052 = vdwg.mxu0
  %1053 = vmatpush.msra.mxu0 0.0
  %1054 = vmatpush.msra.mxu0 0.0
  %1055 = vmatpush.msra.mxu0 0.0
  %1056 = vmatpush.msra.mxu0 0.0
  %1057 = vmatpush.msra.mxu0 0.0
  %1058 = vmatpush.msra.mxu0 0.0
  %1059 = vmatpush.msra.mxu0 0.0
  %1060 = vmatpush.msra.mxu0 0.0
  %1061 = vmatpush.msra.mxu0 0.0
  %1062 = vmatpush.msra.mxu0 0.0
  %1063 = vmatpush.msra.mxu0 0.0
  %1064 = vmatpush.msra.mxu0 0.0
  %1065 = vmatpush.msra.mxu0 0.0
  %1066 = vmatpush.msra.mxu0 0.0
  %1067 = vmatpush.msra.mxu0 0.0
  %v1068 = vand.u32 %v840, 4294901760
  %1069 = vmatpush.msra.mxu0 %v1068
  %v1070 = vand.u32 %v23, 4294901760
  %v1071 = vsub.f32 %v23, %v1070
  %v1072 = vand.u32 %v1071, 4294901760
  %1073 = vmatmul.f32.gmra.mxu0 %v1072
  %v1074 = vpop.f32.mrf.mxu0
  %v1075 = vadd.f32 %v1011, %v1074
  %v1076 = vand.u32 %v26, 4294901760
  %v1077 = vsub.f32 %v26, %v1076
  %v1078 = vand.u32 %v1077, 4294901760
  %1079 = vmatmul.f32.gmra.mxu0 %v1078
  %v1080 = vpop.f32.mrf.mxu0
  %v1081 = vadd.f32 %v1016, %v1080
  %v1082 = vand.u32 %v29, 4294901760
  %v1083 = vsub.f32 %v29, %v1082
  %v1084 = vand.u32 %v1083, 4294901760
  %1085 = vmatmul.f32.gmra.mxu0 %v1084
  %v1086 = vpop.f32.mrf.mxu0
  %v1087 = vadd.f32 %v1021, %v1086
  %v1088 = vand.u32 %v32, 4294901760
  %v1089 = vsub.f32 %v32, %v1088
  %v1090 = vand.u32 %v1089, 4294901760
  %1091 = vmatmul.f32.gmra.mxu0 %v1090
  %v1092 = vpop.f32.mrf.mxu0
  %v1093 = vadd.f32 %v1026, %v1092
  %v1094 = vand.u32 %v35, 4294901760
  %v1095 = vsub.f32 %v35, %v1094
  %v1096 = vand.u32 %v1095, 4294901760
  %1097 = vmatmul.f32.gmra.mxu0 %v1096
  %v1098 = vpop.f32.mrf.mxu0
  %v1099 = vadd.f32 %v1031, %v1098
  %v1100 = vand.u32 %v38, 4294901760
  %v1101 = vsub.f32 %v38, %v1100
  %v1102 = vand.u32 %v1101, 4294901760
  %1103 = vmatmul.f32.gmra.mxu0 %v1102
  %v1104 = vpop.f32.mrf.mxu0
  %v1105 = vadd.f32 %v1036, %v1104
  %v1106 = vand.u32 %v41, 4294901760
  %v1107 = vsub.f32 %v41, %v1106
  %v1108 = vand.u32 %v1107, 4294901760
  %1109 = vmatmul.f32.gmra.mxu0 %v1108
  %v1110 = vpop.f32.mrf.mxu0
  %v1111 = vadd.f32 %v1041, %v1110
  %v1112 = vand.u32 %v44, 4294901760
  %v1113 = vsub.f32 %v44, %v1112
  %v1114 = vand.u32 %v1113, 4294901760
  %1115 = vmatmul.f32.gmra.mxu0 %v1114
  %v1116 = vpop.f32.mrf.mxu0
  %v1117 = vadd.f32 %v1046, %v1116
  %v1118 = vand.u32 %v47, 4294901760
  %v1119 = vsub.f32 %v47, %v1118
  %v1120 = vand.u32 %v1119, 4294901760
  %1121 = vmatmul.f32.gmra.mxu0 %v1120
  %v1122 = vpop.f32.mrf.mxu0
  %v1123 = vadd.f32 %v1051, %v1122
  %1124 = vdwg.mxu0
  %1125 = vmatpush.msra.mxu0 0.0
  %1126 = vmatpush.msra.mxu0 0.0
  %1127 = vmatpush.msra.mxu0 0.0
  %1128 = vmatpush.msra.mxu0 0.0
  %1129 = vmatpush.msra.mxu0 0.0
  %1130 = vmatpush.msra.mxu0 0.0
  %1131 = vmatpush.msra.mxu0 0.0
  %1132 = vmatpush.msra.mxu0 0.0
  %1133 = vmatpush.msra.mxu0 0.0
  %1134 = vmatpush.msra.mxu0 0.0
  %1135 = vmatpush.msra.mxu0 0.0
  %1136 = vmatpush.msra.mxu0 0.0
  %1137 = vmatpush.msra.mxu0 0.0
  %1138 = vmatpush.msra.mxu0 0.0
  %1139 = vmatpush.msra.mxu0 0.0
  %v1140 = vand.u32 %v840, 4294901760
  %v1141 = vsub.f32 %v840, %v1140
  %v1142 = vand.u32 %v1141, 4294901760
  %1143 = vmatpush.msra.mxu0 %v1142
  %v1144 = vand.u32 %v23, 4294901760
  %1145 = vmatmul.f32.gmra.mxu0 %v1144
  %v1146 = vpop.f32.mrf.mxu0
  %v1147 = vadd.f32 %v1075, %v1146
  %v1148 = vand.u32 %v26, 4294901760
  %1149 = vmatmul.f32.gmra.mxu0 %v1148
  %v1150 = vpop.f32.mrf.mxu0
  %v1151 = vadd.f32 %v1081, %v1150
  %v1152 = vand.u32 %v29, 4294901760
  %1153 = vmatmul.f32.gmra.mxu0 %v1152
  %v1154 = vpop.f32.mrf.mxu0
  %v1155 = vadd.f32 %v1087, %v1154
  %v1156 = vand.u32 %v32, 4294901760
  %1157 = vmatmul.f32.gmra.mxu0 %v1156
  %v1158 = vpop.f32.mrf.mxu0
  %v1159 = vadd.f32 %v1093, %v1158
  %v1160 = vand.u32 %v35, 4294901760
  %1161 = vmatmul.f32.gmra.mxu0 %v1160
  %v1162 = vpop.f32.mrf.mxu0
  %v1163 = vadd.f32 %v1099, %v1162
  %v1164 = vand.u32 %v38, 4294901760
  %1165 = vmatmul.f32.gmra.mxu0 %v1164
  %v1166 = vpop.f32.mrf.mxu0
  %v1167 = vadd.f32 %v1105, %v1166
  %v1168 = vand.u32 %v41, 4294901760
  %1169 = vmatmul.f32.gmra.mxu0 %v1168
  %v1170 = vpop.f32.mrf.mxu0
  %v1171 = vadd.f32 %v1111, %v1170
  %v1172 = vand.u32 %v44, 4294901760
  %1173 = vmatmul.f32.gmra.mxu0 %v1172
  %v1174 = vpop.f32.mrf.mxu0
  %v1175 = vadd.f32 %v1117, %v1174
  %v1176 = vand.u32 %v47, 4294901760
  %1177 = vmatmul.f32.gmra.mxu0 %v1176
  %v1178 = vpop.f32.mrf.mxu0
  %v1179 = vadd.f32 %v1123, %v1178
  %1180 = vdwg.mxu0
  %1181 = vmatpush.msra.mxu0 0.0
  %1182 = vmatpush.msra.mxu0 0.0
  %1183 = vmatpush.msra.mxu0 0.0
  %1184 = vmatpush.msra.mxu0 0.0
  %1185 = vmatpush.msra.mxu0 0.0
  %1186 = vmatpush.msra.mxu0 0.0
  %1187 = vmatpush.msra.mxu0 0.0
  %1188 = vmatpush.msra.mxu0 0.0
  %1189 = vmatpush.msra.mxu0 0.0
  %1190 = vmatpush.msra.mxu0 0.0
  %1191 = vmatpush.msra.mxu0 0.0
  %1192 = vmatpush.msra.mxu0 0.0
  %1193 = vmatpush.msra.mxu0 0.0
  %1194 = vmatpush.msra.mxu0 0.0
  %1195 = vmatpush.msra.mxu0 0.0
  %v1196 = vand.u32 %v840, 4294901760
  %1197 = vmatpush.msra.mxu0 %v1196
  %v1198 = vand.u32 %v23, 4294901760
  %1199 = vmatmul.f32.gmra.mxu0 %v1198
  %v1200 = vpop.f32.mrf.mxu0
  %v1201 = vadd.f32 %v1147, %v1200
  %v1202 = vand.u32 %v26, 4294901760
  %1203 = vmatmul.f32.gmra.mxu0 %v1202
  %v1204 = vpop.f32.mrf.mxu0
  %v1205 = vadd.f32 %v1151, %v1204
  %v1206 = vand.u32 %v29, 4294901760
  %1207 = vmatmul.f32.gmra.mxu0 %v1206
  %v1208 = vpop.f32.mrf.mxu0
  %v1209 = vadd.f32 %v1155, %v1208
  %v1210 = vand.u32 %v32, 4294901760
  %1211 = vmatmul.f32.gmra.mxu0 %v1210
  %v1212 = vpop.f32.mrf.mxu0
  %v1213 = vadd.f32 %v1159, %v1212
  %v1214 = vand.u32 %v35, 4294901760
  %1215 = vmatmul.f32.gmra.mxu0 %v1214
  %v1216 = vpop.f32.mrf.mxu0
  %v1217 = vadd.f32 %v1163, %v1216
  %v1218 = vand.u32 %v38, 4294901760
  %1219 = vmatmul.f32.gmra.mxu0 %v1218
  %v1220 = vpop.f32.mrf.mxu0
  %v1221 = vadd.f32 %v1167, %v1220
  %v1222 = vand.u32 %v41, 4294901760
  %1223 = vmatmul.f32.gmra.mxu0 %v1222
  %v1224 = vpop.f32.mrf.mxu0
  %v1225 = vadd.f32 %v1171, %v1224
  %v1226 = vand.u32 %v44, 4294901760
  %1227 = vmatmul.f32.gmra.mxu0 %v1226
  %v1228 = vpop.f32.mrf.mxu0
  %v1229 = vadd.f32 %v1175, %v1228
  %v1230 = vand.u32 %v47, 4294901760
  %1231 = vmatmul.f32.gmra.mxu0 %v1230
  %v1232 = vpop.f32.mrf.mxu0
  %v1233 = vadd.f32 %v1179, %v1232
  %1234 = vdwg.mxu0
  %v1235 = vmul.f32 %v409, %v409
  %v1236 = vmul.f32 %v413, %v413
  %v1237 = vmul.f32 %v417, %v417
  %v1238 = vmul.f32 %v421, %v421
  %v1239 = vmul.f32 %v805, %v805
  %v1240 = vmul.f32 %v809, %v809
  %v1241 = vmul.f32 %v813, %v813
  %v1242 = vmul.f32 %v817, %v817
  %v1243 = vadd.f32 %v1235, %v1239
  %v1244 = vadd.f32 %v1236, %v1240
  %v1245 = vadd.f32 %v1237, %v1241
  %v1246 = vadd.f32 %v1238, %v1242
  %v1247 = vmul.f32 %v1201, %v1201
  %v1248 = vmul.f32 %v1205, %v1205
  %v1249 = vmul.f32 %v1209, %v1209
  %v1250 = vmul.f32 %v1213, %v1213
  %v1251 = vadd.f32 %v1243, %v1247
  %v1252 = vadd.f32 %v1244, %v1248
  %v1253 = vadd.f32 %v1245, %v1249
  %v1254 = vadd.f32 %v1246, %v1250
  %v1255 = vrsqrt.pop %v1251
  %v1256 = vmul.f32 %v1255, %v1251
  %v1257 = vmul.f32 %v1256, %v1255
  %v1258 = vmul.f32 0.5, %v1257
  %v1259 = vsub.f32 1.5, %v1258
  %v1260 = vmul.f32 %v1255, %v1259
  %v1261 = vmul.f32 %v1251, %v1260
  %vm1262 = vcmp.eq.f32.partialorder %v1251, inf
  %v1263 = vsel %vm1262, %v1251, %v1261
  %vm1264 = vcmp.eq.f32.partialorder %v1251, 0.0
  %v1265 = vand.u32 %v1251, 2147483648
  %v1266 = vsel %vm1264, %v1265, %v1263
  %v1267 = vrsqrt.pop %v1252
  %v1268 = vmul.f32 %v1267, %v1252
  %v1269 = vmul.f32 %v1268, %v1267
  %v1270 = vmul.f32 0.5, %v1269
  %v1271 = vsub.f32 1.5, %v1270
  %v1272 = vmul.f32 %v1267, %v1271
  %v1273 = vmul.f32 %v1252, %v1272
  %vm1274 = vcmp.eq.f32.partialorder %v1252, inf
  %v1275 = vsel %vm1274, %v1252, %v1273
  %vm1276 = vcmp.eq.f32.partialorder %v1252, 0.0
  %v1277 = vand.u32 %v1252, 2147483648
  %v1278 = vsel %vm1276, %v1277, %v1275
  %v1279 = vrsqrt.pop %v1253
  %v1280 = vmul.f32 %v1279, %v1253
  %v1281 = vmul.f32 %v1280, %v1279
  %v1282 = vmul.f32 0.5, %v1281
  %v1283 = vsub.f32 1.5, %v1282
  %v1284 = vmul.f32 %v1279, %v1283
  %v1285 = vmul.f32 %v1253, %v1284
  %vm1286 = vcmp.eq.f32.partialorder %v1253, inf
  %v1287 = vsel %vm1286, %v1253, %v1285
  %vm1288 = vcmp.eq.f32.partialorder %v1253, 0.0
  %v1289 = vand.u32 %v1253, 2147483648
  %v1290 = vsel %vm1288, %v1289, %v1287
  %v1291 = vrsqrt.pop %v1254
  %v1292 = vmul.f32 %v1291, %v1254
  %v1293 = vmul.f32 %v1292, %v1291
  %v1294 = vmul.f32 0.5, %v1293
  %v1295 = vsub.f32 1.5, %v1294
  %v1296 = vmul.f32 %v1291, %v1295
  %v1297 = vmul.f32 %v1254, %v1296
  %vm1298 = vcmp.eq.f32.partialorder %v1254, inf
  %v1299 = vsel %vm1298, %v1254, %v1297
  %vm1300 = vcmp.eq.f32.partialorder %v1254, 0.0
  %v1301 = vand.u32 %v1254, 2147483648
  %v1302 = vsel %vm1300, %v1301, %v1299
  %1303 = vst [vmem:[%s2] sm:$0xff] %v1266
  %1304 = vst [vmem:[%s2 + $0x8] sm:$0xff] %v1278
  %1305 = vst [vmem:[%s2 + $0x10] sm:$0xff] %v1290
  %1306 = vst [vmem:[%s2 + $0x18] sm:$0xff] %v1302
  %v1307 = vmul.f32 %v425, %v429
  %v1308 = vmul.f32 %v821, %v825
  %v1309 = vadd.f32 %v1307, %v1308
  %v1310 = vmul.f32 %v1217, %v1221
  %v1311 = vadd.f32 %v1309, %v1310
  %v1312 = vmul.f32 %v425, %v425
  %v1313 = vmul.f32 %v821, %v821
  %v1314 = vadd.f32 %v1312, %v1313
  %v1315 = vmul.f32 %v1217, %v1217
  %v1316 = vadd.f32 %v1314, %v1315
  %v1317 = vmul.f32 %v429, %v429
  %v1318 = vmul.f32 %v825, %v825
  %v1319 = vadd.f32 %v1317, %v1318
  %v1320 = vmul.f32 %v1221, %v1221
  %v1321 = vadd.f32 %v1319, %v1320
  %v1322 = vmul.f32 %v1316, %v1321
  %v1323 = vrsqrt.pop %v1322
  %v1324 = vmul.f32 %v1323, %v1322
  %v1325 = vmul.f32 %v1324, %v1323
  %v1326 = vmul.f32 0.5, %v1325
  %v1327 = vsub.f32 1.5, %v1326
  %v1328 = vmul.f32 %v1323, %v1327
  %vm1329 = vweird.f32 %v1322
  %vm1330 = vweird.f32 %v1323
  %vm1331 = vmor %vm1329, %vm1330
  %v1332 = vsel %vm1331, %v1323, %v1328
  %v1333 = vmul.f32 %v1311, %v1332
  %v1334 = vmax.f32 %v1333, -1.0
  %v1335 = vmin.f32 %v1334, 1.0
  %1336 = vst [vmem:[%s2 + $0x20] sm:$0xff] %v1335
  %v1337 = vmul.f32 %v829, %v1229
  %v1338 = vmul.f32 %v1225, %v833
  %v1339 = vsub.f32 %v1337, %v1338
  %v1340 = vmul.f32 %v1225, %v437
  %v1341 = vmul.f32 %v433, %v1229
  %v1342 = vsub.f32 %v1340, %v1341
  %v1343 = vmul.f32 %v433, %v833
  %v1344 = vmul.f32 %v829, %v437
  %v1345 = vsub.f32 %v1343, %v1344
  %v1346 = vmul.f32 %v833, %v1233
  %v1347 = vmul.f32 %v1229, %v837
  %v1348 = vsub.f32 %v1346, %v1347
  %v1349 = vmul.f32 %v1229, %v441
  %v1350 = vmul.f32 %v437, %v1233
  %v1351 = vsub.f32 %v1349, %v1350
  %v1352 = vmul.f32 %v437, %v837
  %v1353 = vmul.f32 %v833, %v441
  %v1354 = vsub.f32 %v1352, %v1353
  %v1355 = vmul.f32 %v1351, %v1229
  %v1356 = vmul.f32 %v1354, %v833
  %v1357 = vsub.f32 %v1355, %v1356
  %v1358 = vmul.f32 %v1354, %v437
  %v1359 = vmul.f32 %v1348, %v1229
  %v1360 = vsub.f32 %v1358, %v1359
  %v1361 = vmul.f32 %v1348, %v833
  %v1362 = vmul.f32 %v1351, %v437
  %v1363 = vsub.f32 %v1361, %v1362
  %v1364 = vmul.f32 %v1339, %v1339
  %v1365 = vmul.f32 %v1342, %v1342
  %v1366 = vadd.f32 %v1364, %v1365
  %v1367 = vmul.f32 %v1345, %v1345
  %v1368 = vadd.f32 %v1366, %v1367
  %v1369 = vrsqrt.pop %v1368
  %v1370 = vmul.f32 %v1369, %v1368
  %v1371 = vmul.f32 %v1370, %v1369
  %v1372 = vmul.f32 0.5, %v1371
  %v1373 = vsub.f32 1.5, %v1372
  %v1374 = vmul.f32 %v1369, %v1373
  %vm1375 = vweird.f32 %v1368
  %vm1376 = vweird.f32 %v1369
  %vm1377 = vmor %vm1375, %vm1376
  %v1378 = vsel %vm1377, %v1369, %v1374
  %v1379 = vmul.f32 %v1339, %v1348
  %v1380 = vmul.f32 %v1342, %v1351
  %v1381 = vadd.f32 %v1379, %v1380
  %v1382 = vmul.f32 %v1345, %v1354
  %v1383 = vadd.f32 %v1381, %v1382
  %v1384 = vmul.f32 %v1383, %v1378
  %v1385 = vmul.f32 %v1348, %v1348
  %v1386 = vmul.f32 %v1351, %v1351
  %v1387 = vadd.f32 %v1385, %v1386
  %v1388 = vmul.f32 %v1354, %v1354
  %v1389 = vadd.f32 %v1387, %v1388
  %v1390 = vrsqrt.pop %v1389
  %v1391 = vmul.f32 %v1390, %v1389
  %v1392 = vmul.f32 %v1391, %v1390
  %v1393 = vmul.f32 0.5, %v1392
  %v1394 = vsub.f32 1.5, %v1393
  %v1395 = vmul.f32 %v1390, %v1394
  %vm1396 = vweird.f32 %v1389
  %vm1397 = vweird.f32 %v1390
  %vm1398 = vmor %vm1396, %vm1397
  %v1399 = vsel %vm1398, %v1390, %v1395
  %v1400 = vmul.f32 %v1384, %v1399
  %1401 = vst [vmem:[%s2 + $0x28] sm:$0xff] %v1400
  %v1402 = vmul.f32 %v1339, %v1357
  %v1403 = vmul.f32 %v1342, %v1360
  %v1404 = vadd.f32 %v1402, %v1403
  %v1405 = vmul.f32 %v1345, %v1363
  %v1406 = vadd.f32 %v1404, %v1405
  %v1407 = vmul.f32 %v1406, %v1378
  %v1408 = vmul.f32 %v1357, %v1357
  %v1409 = vmul.f32 %v1360, %v1360
  %v1410 = vadd.f32 %v1408, %v1409
  %v1411 = vmul.f32 %v1363, %v1363
  %v1412 = vadd.f32 %v1410, %v1411
  %v1413 = vrsqrt.pop %v1412
  %v1414 = vmul.f32 %v1413, %v1412
  %v1415 = vmul.f32 %v1414, %v1413
  %v1416 = vmul.f32 0.5, %v1415
  %v1417 = vsub.f32 1.5, %v1416
  %v1418 = vmul.f32 %v1413, %v1417
  %vm1419 = vweird.f32 %v1412
  %vm1420 = vweird.f32 %v1413
  %vm1421 = vmor %vm1419, %vm1420
  %v1422 = vsel %vm1421, %v1413, %v1418
  %v1423 = vmul.f32 %v1407, %v1422
  %1424 = vst [vmem:[%s2 + $0x30] sm:$0xff] %v1423
  // Predicated region
  $region10: #{forward_slab.1} parent=0 // pred_check
    _
  $region11: #{forward_slab.1} parent=0 // pred_check_branch
    %1426 = sbr.rel (0) target = $region13
  $region12: #{forward_slab.1} parent=0 // pred_region
    _
  $region13: #{forward_slab.1} parent=0 // pred_fallthru
    _
  // Predicated region
  $region14: #{forward_slab.1} parent=0 // pred_check
    _
  $region15: #{forward_slab.1} parent=0 // pred_check_branch
    %1428 = sbr.rel (0) target = $region17
  $region16: #{forward_slab.1} parent=0 // pred_region
    _
  $region17: #{forward_slab.1} parent=0 // pred_fallthru
    _

</llo_original>
